<compile_context>
chip_gen: v7x
topology: tpu7x:2x2x1
jax: 0.10.0
libtpu: 0.0.40
codegen_flags: <defaults>
</compile_context>

<pallas_src>
import math

import jax
import jax.numpy as jnp
from jax import lax
from jax.experimental import pallas as pl
from jax.experimental.pallas import tpu as pltpu

_BN_EPS = 1e-5


# ------------------------------- Pallas kernel -------------------------------

def cdf_block_kernel(hsi_ref, pat_ref, wf_ref, bf_ref, wr_ref, wi_ref,
                     fr_ref, fi_ref, gr_ref, gi_ref,
                     rkr_ref, rki_ref, akr_ref, bkr_ref,
                     o1_ref, o2_ref):
    """Fused MyCDFBlock forward for one batch element.

    Activations are (C, P) slabs (P = a*b, lane-dense) whose row-major flat order
    equals the NCHW flat order of the original (C, a, b) tensor, so GlobalFilter's
    `.view(a, b, C)` is a free reshape to (a, b*C).
    """
    C, P = hsi_ref.shape[1], hsi_ref.shape[2]
    a = fr_ref.shape[0]
    b = P // a
    f32 = jnp.float32

    hsi = hsi_ref[0]                                            # (C, P)
    pat = pat_ref[0]                                            # (Cin*9, P)

    # --- conv2D: Conv2d(3x3, pad=0) + BatchNorm2d(eval, folded) + ReLU ------
    sar = jnp.dot(wf_ref[...], pat, preferred_element_type=f32) + bf_ref[...]
    sar = jnp.maximum(sar, 0.0)                                 # (C, P)

    # --- jc = hsi * sar -------------------------------------------------------
    jc = hsi * sar                                              # (C, P)

    # --- GlobalFilter: rfft2 -> complex weight -> irfft2 (norm='ortho') -----
    # NCHW flat buffer reinterpreted as (a, b*C) == torch's x.view(B, a, b, C).
    x1 = jc.reshape(a, b * C)
    # forward DFT over n1 (rows)
    tr = jnp.dot(fr_ref[...], x1, preferred_element_type=f32)   # (a, b*C)
    ti = jnp.dot(fi_ref[...], x1, preferred_element_type=f32)
    # forward rDFT over n2 (Kronecker-expanded so the channel axis rides along)
    zr = (jnp.dot(tr, rkr_ref[...], preferred_element_type=f32)
          - jnp.dot(ti, rki_ref[...], preferred_element_type=f32))   # (a, K*C)
    zi = (jnp.dot(tr, rki_ref[...], preferred_element_type=f32)
          + jnp.dot(ti, rkr_ref[...], preferred_element_type=f32))
    # complex multiply by the learned filter weight
    wr = wr_ref[...]
    wi = wi_ref[...]
    pr = zr * wr - zi * wi
    pi = zr * wi + zi * wr
    # inverse DFT over k1
    ur = (jnp.dot(gr_ref[...], pr, preferred_element_type=f32)
          - jnp.dot(gi_ref[...], pi, preferred_element_type=f32))    # (a, K*C)
    ui = (jnp.dot(gr_ref[...], pi, preferred_element_type=f32)
          + jnp.dot(gi_ref[...], pr, preferred_element_type=f32))
    # C2R over k2 (imag parts of DC/Nyquist bins drop out by construction)
    y = (jnp.dot(ur, akr_ref[...], preferred_element_type=f32)
         + jnp.dot(ui, bkr_ref[...], preferred_element_type=f32))    # (a, b*C)
    jcf = (y * (1.0 / (a * b))).reshape(C, P)                   # back to NCHW order

    # --- combine --------------------------------------------------------------
    jd = jnp.abs(hsi - sar)
    jf = jcf * hsi + jcf * sar + jd
    o1_ref[0] = hsi + jf
    o2_ref[0] = sar + jf


# --------------------- parameter / layout preprocessing ----------------------

def _filter_matrices(a, b, C):
    """Real matrices implementing ortho rfft2 / irfft2 over an (a, b) grid,
    Kronecker-expanded with I_C so the trailing channel slot of the viewed
    (a, b, C) tensor is carried through plain 2-D matmuls (no transposes)."""
    two_pi = 2.0 * math.pi
    ia = jnp.arange(a)
    ang_a = (two_pi / a) * ((ia[:, None] * ia[None, :]) % a).astype(jnp.float32)
    fr, fi = jnp.cos(ang_a), -jnp.sin(ang_a)        # exp(-2i*pi*k1*n1/a)
    gr, gi = jnp.cos(ang_a), jnp.sin(ang_a)         # exp(+2i*pi*m1*k1/a)

    K = b // 2 + 1
    nb = jnp.arange(b)
    kb = jnp.arange(K)
    ang_f = (two_pi / b) * ((nb[:, None] * kb[None, :]) % b).astype(jnp.float32)
    rr, ri = jnp.cos(ang_f), -jnp.sin(ang_f)        # (b, K): exp(-2i*pi*n2*k2/b)

    ang_i = (two_pi / b) * ((kb[:, None] * nb[None, :]) % b).astype(jnp.float32)
    w2 = jnp.full((K, 1), 2.0, jnp.float32).at[0, 0].set(1.0)
    if b % 2 == 0:
        w2 = w2.at[K - 1, 0].set(1.0)               # Nyquist bin (real-only)
    ar = w2 * jnp.cos(ang_i)                        # (K, b)
    br = -w2 * jnp.sin(ang_i)

    eye = jnp.eye(C, dtype=jnp.float32)
    return (fr, fi, gr, gi,
            jnp.kron(rr, eye), jnp.kron(ri, eye),   # (b*C, K*C)
            jnp.kron(ar, eye), jnp.kron(br, eye))   # (K*C, b*C)


def _im2col_3x3_valid(x):
    """(B, Cin, H, W) -> (B, Cin*9, (H-2)*(W-2)); pure layout glue."""
    Bz, Cin, H, W = x.shape
    a, b = H - 2, W - 2
    cols = [x[:, :, di:di + a, dj:dj + b] for di in range(3) for dj in range(3)]
    pat = jnp.stack(cols, axis=2)                   # (B, Cin, 9, a, b)
    return pat.reshape(Bz, Cin * 9, a * b)


def mycdf_forward(params, hsi, sar):
    B, C, a, b = hsi.shape
    P = a * b
    Bs, Cin, Hs, Ws = sar.shape
    assert Bs == B and Hs == a + 2 and Ws == b + 2
    F = Cin * 9
    K = b // 2 + 1

    # wrapper-side layout + parameter folding (input-independent preprocessing)
    hsi2 = hsi.reshape(B, C, P)
    patches = _im2col_3x3_valid(sar)                # (B, F, P)

    scale = params["bn_gamma"] / jnp.sqrt(params["bn_var"] + _BN_EPS)
    wf = params["conv_w"].reshape(C, F) * scale[:, None]
    bf = ((params["conv_b"] - params["bn_mean"]) * scale + params["bn_beta"])[:, None]

    wr = params["filt_w"][..., 0].reshape(a, K * C)
    wi = params["filt_w"][..., 1].reshape(a, K * C)
    fr, fi, gr, gi, rkr, rki, akr, bkr = _filter_matrices(a, b, C)

    def batch_spec(s):
        return pl.BlockSpec((1,) + s, lambda i: (i, 0, 0))

    def full_spec(s):
        return pl.BlockSpec(s, lambda i: (0,) * len(s))

    out_sds = jax.ShapeDtypeStruct((B, C, P), jnp.float32)
    o1, o2 = pl.pallas_call(
        cdf_block_kernel,
        out_shape=(out_sds, out_sds),
        grid_spec=pltpu.PrefetchScalarGridSpec(
            num_scalar_prefetch=0,
            grid=(B,),
            in_specs=[
                batch_spec((C, P)),                              # hsi
                batch_spec((F, P)),                              # im2col(sar)
                full_spec((C, F)), full_spec((C, 1)),            # folded conv+BN
                full_spec((a, K * C)), full_spec((a, K * C)),    # filter W (re, im)
                full_spec((a, a)), full_spec((a, a)),            # fwd DFT over n1
                full_spec((a, a)), full_spec((a, a)),            # inv DFT over k1
                full_spec((b * C, K * C)), full_spec((b * C, K * C)),  # fwd rDFT n2
                full_spec((K * C, b * C)), full_spec((K * C, b * C)),  # inv C2R k2
            ],
            out_specs=[batch_spec((C, P)), batch_spec((C, P))],
        ),
        compiler_params=pltpu.CompilerParams(
            dimension_semantics=("parallel",)),
    )(hsi2, patches, wf, bf, wr, wi, fr, fi, gr, gi, rkr, rki, akr, bkr)
    return o1.reshape(B, C, a, b), o2.reshape(B, C, a, b)


# ---------------------------- pure-JAX reference -----------------------------

def _ref_forward(params, hsi, sar):
    conv = lax.conv_general_dilated(
        sar, params["conv_w"], window_strides=(1, 1), padding="VALID",
        dimension_numbers=("NCHW", "OIHW", "NCHW"))
    conv = conv + params["conv_b"][None, :, None, None]
    scale = params["bn_gamma"] / jnp.sqrt(params["bn_var"] + _BN_EPS)
    bn = ((conv - params["bn_mean"][None, :, None, None])
          * scale[None, :, None, None] + params["bn_beta"][None, :, None, None])
    sar_c = jnp.maximum(bn, 0.0)

    jc = hsi * sar_c
    B, C, H, W = jc.shape
    a = int(math.sqrt(H * W))
    xv = jc.reshape(B, a, a, C)                     # torch .view (flat reinterpret)
    xf = jnp.fft.rfft2(xv, axes=(1, 2), norm="ortho")
    wc = params["filt_w"][..., 0] + 1j * params["filt_w"][..., 1]
    yv = jnp.fft.irfft2(xf * wc, s=(a, a), axes=(1, 2), norm="ortho")
    jcf = yv.reshape(B, C, H, W)

    jd = jnp.abs(hsi - sar_c)
    jf = jcf * hsi + jcf * sar_c + jd
    return hsi + jf, sar_c + jf


# ---------------------------------- params -----------------------------------

def init_params(key, *, in_channels, out_channels, hw):
    K = hw // 2 + 1
    ks = jax.random.split(key, 7)
    return dict(
        conv_w=0.1 * jax.random.normal(ks[0], (out_channels, in_channels, 3, 3), jnp.float32),
        conv_b=0.1 * jax.random.normal(ks[1], (out_channels,), jnp.float32),
        bn_gamma=1.0 + 0.1 * jax.random.normal(ks[2], (out_channels,), jnp.float32),
        bn_beta=0.1 * jax.random.normal(ks[3], (out_channels,), jnp.float32),
        bn_mean=0.1 * jax.random.normal(ks[4], (out_channels,), jnp.float32),
        bn_var=jax.random.uniform(ks[5], (out_channels,), jnp.float32, 0.5, 1.5),
        filt_w=0.02 * jax.random.normal(ks[6], (hw, K, out_channels, 2), jnp.float32),
    )


# ----------------------------------- main -------------------------------------

if __name__ == "__main__":
    batch, in_channels, out_channels, hw = 2, 4, 16, 16   # dim == out_channels
    key = jax.random.PRNGKey(0)
    k_hsi, k_sar, k_par = jax.random.split(key, 3)
    hsi = jax.random.normal(k_hsi, (batch, out_channels, hw, hw), jnp.float32)
    sar = jax.random.normal(k_sar, (batch, in_channels, hw + 2, hw + 2), jnp.float32)
    params = init_params(k_par, in_channels=in_channels, out_channels=out_channels, hw=hw)

    fwd = jax.jit(mycdf_forward)
    out1, out2 = fwd(params, hsi, sar)
    out1 = jax.block_until_ready(out1)
    out2 = jax.block_until_ready(out2)

    ref1, ref2 = _ref_forward(params, hsi, sar)
    ref1 = jax.block_until_ready(ref1)
    ref2 = jax.block_until_ready(ref2)

    assert out1.shape == hsi.shape and out2.shape == hsi.shape, (out1.shape, out2.shape)
    err1 = float(jnp.max(jnp.abs(out1 - ref1)))
    err2 = float(jnp.max(jnp.abs(out2 - ref2)))
    assert jnp.allclose(out1, ref1, atol=1e-4, rtol=1e-4), err1
    assert jnp.allclose(out2, ref2, atol=1e-4, rtol=1e-4), err2

    print("KERNEL_OK")
</pallas_src>

<mosaic_0001>
module attributes {stable_mosaic.version = 11 : i64} {
  func.func @cdf_block_kernel(%arg0: i32, %arg1: memref<1x16x256xf32, #tpu.memory_space<vmem>>, %arg2: memref<1x36x256xf32, #tpu.memory_space<vmem>>, %arg3: memref<16x36xf32, #tpu.memory_space<vmem>>, %arg4: memref<16x1xf32, #tpu.memory_space<vmem>>, %arg5: memref<16x144xf32, #tpu.memory_space<vmem>>, %arg6: memref<16x144xf32, #tpu.memory_space<vmem>>, %arg7: memref<16x16xf32, #tpu.memory_space<vmem>>, %arg8: memref<16x16xf32, #tpu.memory_space<vmem>>, %arg9: memref<16x16xf32, #tpu.memory_space<vmem>>, %arg10: memref<16x16xf32, #tpu.memory_space<vmem>>, %arg11: memref<256x144xf32, #tpu.memory_space<vmem>>, %arg12: memref<256x144xf32, #tpu.memory_space<vmem>>, %arg13: memref<144x256xf32, #tpu.memory_space<vmem>>, %arg14: memref<144x256xf32, #tpu.memory_space<vmem>>, %arg15: memref<1x16x256xf32, #tpu.memory_space<vmem>>, %arg16: memref<1x16x256xf32, #tpu.memory_space<vmem>>) attributes {dimension_semantics = [#tpu.dimension_semantics<parallel>], iteration_bounds = array<i64: 2>, scalar_prefetch = 0 : i64, scratch_operands = 0 : i64, tpu.core_type = #tpu.core_type<tc>, window_params = [{transform_indices = @transform_0, window_bounds = array<i64: 1, 16, 256>}, {transform_indices = @transform_1, window_bounds = array<i64: 1, 36, 256>}, {pipeline_mode = #tpu.pipeline_mode<synchronous>, transform_indices = @transform_2, window_bounds = array<i64: 16, 36>}, {pipeline_mode = #tpu.pipeline_mode<synchronous>, transform_indices = @transform_3, window_bounds = array<i64: 16, 1>}, {pipeline_mode = #tpu.pipeline_mode<synchronous>, transform_indices = @transform_4, window_bounds = array<i64: 16, 144>}, {pipeline_mode = #tpu.pipeline_mode<synchronous>, transform_indices = @transform_5, window_bounds = array<i64: 16, 144>}, {pipeline_mode = #tpu.pipeline_mode<synchronous>, transform_indices = @transform_6, window_bounds = array<i64: 16, 16>}, {pipeline_mode = #tpu.pipeline_mode<synchronous>, transform_indices = @transform_7, window_bounds = array<i64: 16, 16>}, {pipeline_mode = #tpu.pipeline_mode<synchronous>, transform_indices = @transform_8, window_bounds = array<i64: 16, 16>}, {pipeline_mode = #tpu.pipeline_mode<synchronous>, transform_indices = @transform_9, window_bounds = array<i64: 16, 16>}, {pipeline_mode = #tpu.pipeline_mode<synchronous>, transform_indices = @transform_10, window_bounds = array<i64: 256, 144>}, {pipeline_mode = #tpu.pipeline_mode<synchronous>, transform_indices = @transform_11, window_bounds = array<i64: 256, 144>}, {pipeline_mode = #tpu.pipeline_mode<synchronous>, transform_indices = @transform_12, window_bounds = array<i64: 144, 256>}, {pipeline_mode = #tpu.pipeline_mode<synchronous>, transform_indices = @transform_13, window_bounds = array<i64: 144, 256>}, {transform_indices = @transform_14, window_bounds = array<i64: 1, 16, 256>}, {transform_indices = @transform_15, window_bounds = array<i64: 1, 16, 256>}]} {
    %c0 = arith.constant 0 : index
    %c0_0 = arith.constant 0 : index
    %c0_1 = arith.constant 0 : index
    %0 = vector.load %arg1[%c0, %c0_0, %c0_1] : memref<1x16x256xf32, #tpu.memory_space<vmem>>, vector<1x16x256xf32>
    %1 = vector.shape_cast %0 : vector<1x16x256xf32> to vector<16x256xf32>
    %c0_2 = arith.constant 0 : index
    %c0_3 = arith.constant 0 : index
    %c0_4 = arith.constant 0 : index
    %2 = vector.load %arg2[%c0_2, %c0_3, %c0_4] : memref<1x36x256xf32, #tpu.memory_space<vmem>>, vector<1x36x256xf32>
    %3 = vector.shape_cast %2 : vector<1x36x256xf32> to vector<36x256xf32>
    %c0_5 = arith.constant 0 : index
    %c0_6 = arith.constant 0 : index
    %4 = vector.load %arg3[%c0_5, %c0_6] : memref<16x36xf32, #tpu.memory_space<vmem>>, vector<16x36xf32>
    %cst = arith.constant dense<0.000000e+00> : vector<16x256xf32>
    %5 = tpu.matmul %4, %3, %cst {dimension_numbers = #tpu.dot_dimension_numbers<[1], [0], [0], [1], [0, 0, 1, 1], [], []>} : vector<16x36xf32>, vector<36x256xf32>, vector<16x256xf32> -> vector<16x256xf32>
    %c0_7 = arith.constant 0 : index
    %c0_8 = arith.constant 0 : index
    %6 = vector.load %arg4[%c0_7, %c0_8] : memref<16x1xf32, #tpu.memory_space<vmem>>, vector<16x1xf32>
    %7 = vector.broadcast %6 : vector<16x1xf32> to vector<16x256xf32>
    %8 = arith.addf %5, %7 : vector<16x256xf32>
    %cst_9 = arith.constant 0.000000e+00 : f32
    %9 = vector.broadcast %cst_9 : f32 to vector<16x256xf32>
    %10 = arith.maximumf %8, %9 : vector<16x256xf32>
    %11 = arith.mulf %1, %10 : vector<16x256xf32>
    %c0_10 = arith.constant 0 : index
    %c0_11 = arith.constant 0 : index
    %12 = vector.load %arg7[%c0_10, %c0_11] : memref<16x16xf32, #tpu.memory_space<vmem>>, vector<16x16xf32>
    %cst_12 = arith.constant dense<0.000000e+00> : vector<16x256xf32>
    %13 = tpu.matmul %12, %11, %cst_12 {dimension_numbers = #tpu.dot_dimension_numbers<[1], [0], [0], [1], [0, 0, 1, 1], [], []>} : vector<16x16xf32>, vector<16x256xf32>, vector<16x256xf32> -> vector<16x256xf32>
    %c0_13 = arith.constant 0 : index
    %c0_14 = arith.constant 0 : index
    %14 = vector.load %arg8[%c0_13, %c0_14] : memref<16x16xf32, #tpu.memory_space<vmem>>, vector<16x16xf32>
    %cst_15 = arith.constant dense<0.000000e+00> : vector<16x256xf32>
    %15 = tpu.matmul %14, %11, %cst_15 {dimension_numbers = #tpu.dot_dimension_numbers<[1], [0], [0], [1], [0, 0, 1, 1], [], []>} : vector<16x16xf32>, vector<16x256xf32>, vector<16x256xf32> -> vector<16x256xf32>
    %c0_16 = arith.constant 0 : index
    %c0_17 = arith.constant 0 : index
    %16 = vector.load %arg11[%c0_16, %c0_17] : memref<256x144xf32, #tpu.memory_space<vmem>>, vector<256x144xf32>
    %cst_18 = arith.constant dense<0.000000e+00> : vector<16x144xf32>
    %17 = tpu.matmul %13, %16, %cst_18 {dimension_numbers = #tpu.dot_dimension_numbers<[1], [0], [0], [1], [0, 0, 1, 1], [], []>} : vector<16x256xf32>, vector<256x144xf32>, vector<16x144xf32> -> vector<16x144xf32>
    %c0_19 = arith.constant 0 : index
    %c0_20 = arith.constant 0 : index
    %18 = vector.load %arg12[%c0_19, %c0_20] : memref<256x144xf32, #tpu.memory_space<vmem>>, vector<256x144xf32>
    %cst_21 = arith.constant dense<0.000000e+00> : vector<16x144xf32>
    %19 = tpu.matmul %15, %18, %cst_21 {dimension_numbers = #tpu.dot_dimension_numbers<[1], [0], [0], [1], [0, 0, 1, 1], [], []>} : vector<16x256xf32>, vector<256x144xf32>, vector<16x144xf32> -> vector<16x144xf32>
    %20 = arith.subf %17, %19 : vector<16x144xf32>
    %c0_22 = arith.constant 0 : index
    %c0_23 = arith.constant 0 : index
    %21 = vector.load %arg12[%c0_22, %c0_23] : memref<256x144xf32, #tpu.memory_space<vmem>>, vector<256x144xf32>
    %cst_24 = arith.constant dense<0.000000e+00> : vector<16x144xf32>
    %22 = tpu.matmul %13, %21, %cst_24 {dimension_numbers = #tpu.dot_dimension_numbers<[1], [0], [0], [1], [0, 0, 1, 1], [], []>} : vector<16x256xf32>, vector<256x144xf32>, vector<16x144xf32> -> vector<16x144xf32>
    %c0_25 = arith.constant 0 : index
    %c0_26 = arith.constant 0 : index
    %23 = vector.load %arg11[%c0_25, %c0_26] : memref<256x144xf32, #tpu.memory_space<vmem>>, vector<256x144xf32>
    %cst_27 = arith.constant dense<0.000000e+00> : vector<16x144xf32>
    %24 = tpu.matmul %15, %23, %cst_27 {dimension_numbers = #tpu.dot_dimension_numbers<[1], [0], [0], [1], [0, 0, 1, 1], [], []>} : vector<16x256xf32>, vector<256x144xf32>, vector<16x144xf32> -> vector<16x144xf32>
    %25 = arith.addf %22, %24 : vector<16x144xf32>
    %c0_28 = arith.constant 0 : index
    %c0_29 = arith.constant 0 : index
    %26 = vector.load %arg5[%c0_28, %c0_29] : memref<16x144xf32, #tpu.memory_space<vmem>>, vector<16x144xf32>
    %c0_30 = arith.constant 0 : index
    %c0_31 = arith.constant 0 : index
    %27 = vector.load %arg6[%c0_30, %c0_31] : memref<16x144xf32, #tpu.memory_space<vmem>>, vector<16x144xf32>
    %28 = arith.mulf %20, %26 : vector<16x144xf32>
    %29 = arith.mulf %25, %27 : vector<16x144xf32>
    %30 = arith.subf %28, %29 : vector<16x144xf32>
    %31 = arith.mulf %20, %27 : vector<16x144xf32>
    %32 = arith.mulf %25, %26 : vector<16x144xf32>
    %33 = arith.addf %31, %32 : vector<16x144xf32>
    %c0_32 = arith.constant 0 : index
    %c0_33 = arith.constant 0 : index
    %34 = vector.load %arg9[%c0_32, %c0_33] : memref<16x16xf32, #tpu.memory_space<vmem>>, vector<16x16xf32>
    %cst_34 = arith.constant dense<0.000000e+00> : vector<16x144xf32>
    %35 = tpu.matmul %34, %30, %cst_34 {dimension_numbers = #tpu.dot_dimension_numbers<[1], [0], [0], [1], [0, 0, 1, 1], [], []>} : vector<16x16xf32>, vector<16x144xf32>, vector<16x144xf32> -> vector<16x144xf32>
    %c0_35 = arith.constant 0 : index
    %c0_36 = arith.constant 0 : index
    %36 = vector.load %arg10[%c0_35, %c0_36] : memref<16x16xf32, #tpu.memory_space<vmem>>, vector<16x16xf32>
    %cst_37 = arith.constant dense<0.000000e+00> : vector<16x144xf32>
    %37 = tpu.matmul %36, %33, %cst_37 {dimension_numbers = #tpu.dot_dimension_numbers<[1], [0], [0], [1], [0, 0, 1, 1], [], []>} : vector<16x16xf32>, vector<16x144xf32>, vector<16x144xf32> -> vector<16x144xf32>
    %38 = arith.subf %35, %37 : vector<16x144xf32>
    %c0_38 = arith.constant 0 : index
    %c0_39 = arith.constant 0 : index
    %39 = vector.load %arg9[%c0_38, %c0_39] : memref<16x16xf32, #tpu.memory_space<vmem>>, vector<16x16xf32>
    %cst_40 = arith.constant dense<0.000000e+00> : vector<16x144xf32>
    %40 = tpu.matmul %39, %33, %cst_40 {dimension_numbers = #tpu.dot_dimension_numbers<[1], [0], [0], [1], [0, 0, 1, 1], [], []>} : vector<16x16xf32>, vector<16x144xf32>, vector<16x144xf32> -> vector<16x144xf32>
    %c0_41 = arith.constant 0 : index
    %c0_42 = arith.constant 0 : index
    %41 = vector.load %arg10[%c0_41, %c0_42] : memref<16x16xf32, #tpu.memory_space<vmem>>, vector<16x16xf32>
    %cst_43 = arith.constant dense<0.000000e+00> : vector<16x144xf32>
    %42 = tpu.matmul %41, %30, %cst_43 {dimension_numbers = #tpu.dot_dimension_numbers<[1], [0], [0], [1], [0, 0, 1, 1], [], []>} : vector<16x16xf32>, vector<16x144xf32>, vector<16x144xf32> -> vector<16x144xf32>
    %43 = arith.addf %40, %42 : vector<16x144xf32>
    %c0_44 = arith.constant 0 : index
    %c0_45 = arith.constant 0 : index
    %44 = vector.load %arg13[%c0_44, %c0_45] : memref<144x256xf32, #tpu.memory_space<vmem>>, vector<144x256xf32>
    %cst_46 = arith.constant dense<0.000000e+00> : vector<16x256xf32>
    %45 = tpu.matmul %38, %44, %cst_46 {dimension_numbers = #tpu.dot_dimension_numbers<[1], [0], [0], [1], [0, 0, 1, 1], [], []>} : vector<16x144xf32>, vector<144x256xf32>, vector<16x256xf32> -> vector<16x256xf32>
    %c0_47 = arith.constant 0 : index
    %c0_48 = arith.constant 0 : index
    %46 = vector.load %arg14[%c0_47, %c0_48] : memref<144x256xf32, #tpu.memory_space<vmem>>, vector<144x256xf32>
    %cst_49 = arith.constant dense<0.000000e+00> : vector<16x256xf32>
    %47 = tpu.matmul %43, %46, %cst_49 {dimension_numbers = #tpu.dot_dimension_numbers<[1], [0], [0], [1], [0, 0, 1, 1], [], []>} : vector<16x144xf32>, vector<144x256xf32>, vector<16x256xf32> -> vector<16x256xf32>
    %48 = arith.addf %45, %47 : vector<16x256xf32>
    %cst_50 = arith.constant 3.906250e-03 : f32
    %49 = vector.broadcast %cst_50 : f32 to vector<16x256xf32>
    %50 = arith.mulf %48, %49 : vector<16x256xf32>
    %51 = arith.subf %1, %10 : vector<16x256xf32>
    %52 = math.absf %51 : vector<16x256xf32>
    %53 = arith.mulf %50, %1 : vector<16x256xf32>
    %54 = arith.mulf %50, %10 : vector<16x256xf32>
    %55 = arith.addf %53, %54 : vector<16x256xf32>
    %56 = arith.addf %55, %52 : vector<16x256xf32>
    %57 = arith.addf %1, %56 : vector<16x256xf32>
    %c0_51 = arith.constant 0 : index
    %c0_52 = arith.constant 0 : index
    %c0_53 = arith.constant 0 : index
    %58 = vector.load %arg15[%c0_51, %c0_52, %c0_53] : memref<1x16x256xf32, #tpu.memory_space<vmem>>, vector<1x16x256xf32>
    %59 = vector.shape_cast %58 : vector<1x16x256xf32> to vector<16x256xf32>
    %60 = vector.shape_cast %57 : vector<16x256xf32> to vector<1x16x256xf32>
    tpu.vector_store %arg15[%c0_51, %c0_52, %c0_53], %60 {strides = array<i32>} : memref<1x16x256xf32, #tpu.memory_space<vmem>>, vector<1x16x256xf32>,
    %61 = arith.addf %10, %56 : vector<16x256xf32>
    %c0_54 = arith.constant 0 : index
    %c0_55 = arith.constant 0 : index
    %c0_56 = arith.constant 0 : index
    %62 = vector.load %arg16[%c0_54, %c0_55, %c0_56] : memref<1x16x256xf32, #tpu.memory_space<vmem>>, vector<1x16x256xf32>
    %63 = vector.shape_cast %62 : vector<1x16x256xf32> to vector<16x256xf32>
    %64 = vector.shape_cast %61 : vector<16x256xf32> to vector<1x16x256xf32>
    tpu.vector_store %arg16[%c0_54, %c0_55, %c0_56], %64 {strides = array<i32>} : memref<1x16x256xf32, #tpu.memory_space<vmem>>, vector<1x16x256xf32>,
    return
  }
  func.func @transform_0(%arg0: i32) -> (i32, i32, i32) {
    %c0_i32 = arith.constant 0 : i32
    %c0_i32_0 = arith.constant 0 : i32
    %c0_i32_1 = arith.constant 0 : i32
    return %arg0, %c0_i32, %c0_i32_0 : i32, i32, i32
  }
  func.func @transform_1(%arg0: i32) -> (i32, i32, i32) {
    %c0_i32 = arith.constant 0 : i32
    %c0_i32_0 = arith.constant 0 : i32
    %c0_i32_1 = arith.constant 0 : i32
    return %arg0, %c0_i32, %c0_i32_0 : i32, i32, i32
  }
  func.func @transform_2(%arg0: i32) -> (i32, i32) {
    %c0_i32 = arith.constant 0 : i32
    %c0_i32_0 = arith.constant 0 : i32
    %c0_i32_1 = arith.constant 0 : i32
    return %c0_i32, %c0_i32_0 : i32, i32
  }
  func.func @transform_3(%arg0: i32) -> (i32, i32) {
    %c0_i32 = arith.constant 0 : i32
    %c0_i32_0 = arith.constant 0 : i32
    %c0_i32_1 = arith.constant 0 : i32
    return %c0_i32, %c0_i32_0 : i32, i32
  }
  func.func @transform_4(%arg0: i32) -> (i32, i32) {
    %c0_i32 = arith.constant 0 : i32
    %c0_i32_0 = arith.constant 0 : i32
    %c0_i32_1 = arith.constant 0 : i32
    return %c0_i32, %c0_i32_0 : i32, i32
  }
  func.func @transform_5(%arg0: i32) -> (i32, i32) {
    %c0_i32 = arith.constant 0 : i32
    %c0_i32_0 = arith.constant 0 : i32
    %c0_i32_1 = arith.constant 0 : i32
    return %c0_i32, %c0_i32_0 : i32, i32
  }
  func.func @transform_6(%arg0: i32) -> (i32, i32) {
    %c0_i32 = arith.constant 0 : i32
    %c0_i32_0 = arith.constant 0 : i32
    %c0_i32_1 = arith.constant 0 : i32
    return %c0_i32, %c0_i32_0 : i32, i32
  }
  func.func @transform_7(%arg0: i32) -> (i32, i32) {
    %c0_i32 = arith.constant 0 : i32
    %c0_i32_0 = arith.constant 0 : i32
    %c0_i32_1 = arith.constant 0 : i32
    return %c0_i32, %c0_i32_0 : i32, i32
  }
  func.func @transform_8(%arg0: i32) -> (i32, i32) {
    %c0_i32 = arith.constant 0 : i32
    %c0_i32_0 = arith.constant 0 : i32
    %c0_i32_1 = arith.constant 0 : i32
    return %c0_i32, %c0_i32_0 : i32, i32
  }
  func.func @transform_9(%arg0: i32) -> (i32, i32) {
    %c0_i32 = arith.constant 0 : i32
    %c0_i32_0 = arith.constant 0 : i32
    %c0_i32_1 = arith.constant 0 : i32
    return %c0_i32, %c0_i32_0 : i32, i32
  }
  func.func @transform_10(%arg0: i32) -> (i32, i32) {
    %c0_i32 = arith.constant 0 : i32
    %c0_i32_0 = arith.constant 0 : i32
    %c0_i32_1 = arith.constant 0 : i32
    return %c0_i32, %c0_i32_0 : i32, i32
  }
  func.func @transform_11(%arg0: i32) -> (i32, i32) {
    %c0_i32 = arith.constant 0 : i32
    %c0_i32_0 = arith.constant 0 : i32
    %c0_i32_1 = arith.constant 0 : i32
    return %c0_i32, %c0_i32_0 : i32, i32
  }
  func.func @transform_12(%arg0: i32) -> (i32, i32) {
    %c0_i32 = arith.constant 0 : i32
    %c0_i32_0 = arith.constant 0 : i32
    %c0_i32_1 = arith.constant 0 : i32
    return %c0_i32, %c0_i32_0 : i32, i32
  }
  func.func @transform_13(%arg0: i32) -> (i32, i32) {
    %c0_i32 = arith.constant 0 : i32
    %c0_i32_0 = arith.constant 0 : i32
    %c0_i32_1 = arith.constant 0 : i32
    return %c0_i32, %c0_i32_0 : i32, i32
  }
  func.func @transform_14(%arg0: i32) -> (i32, i32, i32) {
    %c0_i32 = arith.constant 0 : i32
    %c0_i32_0 = arith.constant 0 : i32
    %c0_i32_1 = arith.constant 0 : i32
    return %arg0, %c0_i32, %c0_i32_0 : i32, i32, i32
  }
  func.func @transform_15(%arg0: i32) -> (i32, i32, i32) {
    %c0_i32 = arith.constant 0 : i32
    %c0_i32_0 = arith.constant 0 : i32
    %c0_i32_1 = arith.constant 0 : i32
    return %arg0, %c0_i32, %c0_i32_0 : i32, i32, i32
  }
}

</mosaic_0001>

<llo_original>
// kernel: mycdf_forward.1
$region0: #{mycdf_forward.1}
  #allocation0 [shape = 'u32[]', space=smem, size = 0x4, offset = 0x4, fixed_abs, tag = 'smem constant byte address 0x4 - core index']
  #allocation1 [shape = 'u32[144,128]{1,0:T(1,128)}', space=vmem, size = 0x12000, scoped, tag = 'internal scratch']
  %s0 = inlined_call_operand.vmem [shape: f32[2,16,256], index: 0, kind: input, shape index: {}]
  %s1 = inlined_call_operand.vmem [shape: f32[2,36,256], index: 1, kind: input, shape index: {}]
  %s2 = inlined_call_operand.vmem [shape: f32[16,36], index: 2, kind: input, shape index: {}]
  %s3 = inlined_call_operand.vmem [shape: f32[16,1], index: 3, kind: input, shape index: {}]
  %s4 = inlined_call_operand.vmem [shape: f32[16,144], index: 4, kind: input, shape index: {}]
  %s5 = inlined_call_operand.vmem [shape: f32[16,144], index: 5, kind: input, shape index: {}]
  %s6 = inlined_call_operand.vmem [shape: f32[16,16], index: 6, kind: input, shape index: {}, may-alias: {6,8}]
  %s7 = inlined_call_operand.vmem [shape: f32[16,16], index: 7, kind: input, shape index: {}]
  %s8 = inlined_call_operand.vmem [shape: f32[16,16], index: 8, kind: input, shape index: {}, may-alias: {6,8}]
  %s9 = inlined_call_operand.vmem [shape: f32[16,16], index: 9, kind: input, shape index: {}]
  %s10 = inlined_call_operand.vmem [shape: f32[256,144], index: 10, kind: input, shape index: {}]
  %s11 = inlined_call_operand.vmem [shape: f32[256,144], index: 11, kind: input, shape index: {}]
  %s12 = inlined_call_operand.vmem [shape: f32[144,256], index: 12, kind: input, shape index: {}]
  %s13 = inlined_call_operand.vmem [shape: f32[144,256], index: 13, kind: input, shape index: {}]
  %s14 = inlined_call_operand.vmem [shape: f32[2,16,256], index: 14, kind: output, shape index: {0}]
  %s15 = inlined_call_operand.vmem [shape: f32[2,16,256], index: 15, kind: output, shape index: {1}]
  %16 = xla_tuple %s14, %s15
  %s17 = sld [smem:[#allocation0]]
  $region97: #{mycdf_forward.1} parent=0
    _
  %s19 = ssub.s32 1, %s17
  %s20 = scalar_select 0, %s19, %s17
  loop: start=0, step=1, limit=4
  $region2: #{mycdf_forward.1} parent=0 // loop_pre_header
    _
  $region3: #{mycdf_forward.1} parent=0 // loop_header
    %s22 = sphi 0, %s26
    %p23 = scmp.ge.s32.totalorder %s22, 4
    %s32 = sphi 0, %s34
    %s35 = sphi 0, %s32
    %s36 = sphi 0, %s35
    %s52 = sphi 0, %s36
    %s58 = sphi 0, %s60
    %s61 = sphi 0, %s58
    %s62 = sphi 0, %s61
    %s78 = sphi 0, %s62
    %s82 = sphi 0, %s82
    %s84 = sphi 0, %s82
    %s85 = sphi 0, %s84
    %s99 = sphi 0, %s85
    %s103 = sphi 0, %s103
    %s105 = sphi 0, %s103
    %s106 = sphi 0, %s105
    %s120 = sphi 0, %s106
    %s124 = sphi 0, %s124
    %s126 = sphi 0, %s124
    %s127 = sphi 0, %s126
    %s141 = sphi 0, %s127
    %s145 = sphi 0, %s145
    %s147 = sphi 0, %s145
    %s148 = sphi 0, %s147
    %s162 = sphi 0, %s148
    %s166 = sphi 0, %s166
    %s168 = sphi 0, %s166
    %s169 = sphi 0, %s168
    %s183 = sphi 0, %s169
    %s187 = sphi 0, %s187
    %s189 = sphi 0, %s187
    %s190 = sphi 0, %s189
    %s204 = sphi 0, %s190
    %s208 = sphi 0, %s208
    %s210 = sphi 0, %s208
    %s211 = sphi 0, %s210
    %s225 = sphi 0, %s211
    %s229 = sphi 0, %s229
    %s231 = sphi 0, %s229
    %s232 = sphi 0, %s231
    %s246 = sphi 0, %s232
    %s250 = sphi 0, %s250
    %s252 = sphi 0, %s250
    %s253 = sphi 0, %s252
    %s267 = sphi 0, %s253
    %s271 = sphi 0, %s271
    %s273 = sphi 0, %s271
    %s274 = sphi 0, %s273
    %s288 = sphi 0, %s274
    %s292 = sphi 0, %s292
    %s294 = sphi 0, %s292
    %s295 = sphi 0, %s294
    %s309 = sphi 0, %s295
    %s313 = sphi 0, %s313
    %s315 = sphi 0, %s313
    %s316 = sphi 0, %s315
    %s330 = sphi 0, %s316
    %s336 = sphi 0, %s338
    %s339 = sphi 0, %s336
    %s340 = sphi 0, %s339
    %s356 = sphi 0, %s340
    %s362 = sphi 0, %s364
    %s365 = sphi 0, %s362
    %s366 = sphi 0, %s365
    %s382 = sphi 0, %s366
  $region4: #{mycdf_forward.1} parent=0 // loop_header_branch
    %25 = sbr.rel (%p23) target = $region8
  $region5: #{mycdf_forward.1} parent=0 // loop_body
    %s27 = ssub.s32 %s22, 1
    %s28 = ssub.s32 %s22, 2
    %s29 = sadd.s32 %s22, 1
    %s30 = ssub.s32 %s22, %s29
    %p31 = scmp.eq.s32.totalorder %s30, 0
    %s33 = sadd.s32 %s32, 1
    %s34 = scalar_select %p31, %s32, %s33
    %p37 = pneg %p31
    %p38 = scmp.eq.s32.totalorder %s22, 1
    %p39 = por %p37, %p38
    %p40 = scmp.ne.s32.totalorder %s32, %s35
    %p41 = scmp.eq.s32.totalorder %s22, 0
    %p42 = por %p40, %p41
    %p43 = scmp.ne.s32.totalorder %s32, %s35
    %p44 = scmp.eq.s32.totalorder %s27, 1
    %p45 = por %p43, %p44
    %p46 = scmp.ne.s32.totalorder %s35, %s36
    %p47 = scmp.eq.s32.totalorder %s27, 0
    %p48 = por %p46, %p47
    %p49 = scmp.ne.s32.totalorder %s35, %s36
    %p50 = scmp.eq.s32.totalorder %s28, 1
    %p51 = por %p49, %p50
    %p53 = scmp.ne.s32.totalorder %s36, %s52
    %p54 = scmp.eq.s32.totalorder %s28, 0
    %p55 = por %p53, %p54
    %s56 = ssub.s32 %s22, %s29
    %p57 = scmp.eq.s32.totalorder %s56, 0
    %s59 = sadd.s32 %s58, 1
    %s60 = scalar_select %p57, %s58, %s59
    %p63 = pneg %p57
    %p64 = scmp.eq.s32.totalorder %s22, 1
    %p65 = por %p63, %p64
    %p66 = scmp.ne.s32.totalorder %s58, %s61
    %p67 = scmp.eq.s32.totalorder %s22, 0
    %p68 = por %p66, %p67
    %p69 = scmp.ne.s32.totalorder %s58, %s61
    %p70 = scmp.eq.s32.totalorder %s27, 1
    %p71 = por %p69, %p70
    %p72 = scmp.ne.s32.totalorder %s61, %s62
    %p73 = scmp.eq.s32.totalorder %s27, 0
    %p74 = por %p72, %p73
    %p75 = scmp.ne.s32.totalorder %s61, %s62
    %p76 = scmp.eq.s32.totalorder %s28, 1
    %p77 = por %p75, %p76
    %p79 = scmp.ne.s32.totalorder %s62, %s78
    %p80 = scmp.eq.s32.totalorder %s28, 0
    %p81 = por %p79, %p80
    %s83 = sadd.s32 %s82, 1
    %p86 = scmp.eq.s32.totalorder %s22, 1
    %p87 = scmp.ne.s32.totalorder %s82, %s84
    %p88 = scmp.eq.s32.totalorder %s22, 0
    %p89 = por %p87, %p88
    %p90 = scmp.ne.s32.totalorder %s82, %s84
    %p91 = scmp.eq.s32.totalorder %s27, 1
    %p92 = por %p90, %p91
    %p93 = scmp.ne.s32.totalorder %s84, %s85
    %p94 = scmp.eq.s32.totalorder %s27, 0
    %p95 = por %p93, %p94
    %p96 = scmp.ne.s32.totalorder %s84, %s85
    %p97 = scmp.eq.s32.totalorder %s28, 1
    %p98 = por %p96, %p97
    %p100 = scmp.ne.s32.totalorder %s85, %s99
    %p101 = scmp.eq.s32.totalorder %s28, 0
    %p102 = por %p100, %p101
    %s104 = sadd.s32 %s103, 1
    %p107 = scmp.eq.s32.totalorder %s22, 1
    %p108 = scmp.ne.s32.totalorder %s103, %s105
    %p109 = scmp.eq.s32.totalorder %s22, 0
    %p110 = por %p108, %p109
    %p111 = scmp.ne.s32.totalorder %s103, %s105
    %p112 = scmp.eq.s32.totalorder %s27, 1
    %p113 = por %p111, %p112
    %p114 = scmp.ne.s32.totalorder %s105, %s106
    %p115 = scmp.eq.s32.totalorder %s27, 0
    %p116 = por %p114, %p115
    %p117 = scmp.ne.s32.totalorder %s105, %s106
    %p118 = scmp.eq.s32.totalorder %s28, 1
    %p119 = por %p117, %p118
    %p121 = scmp.ne.s32.totalorder %s106, %s120
    %p122 = scmp.eq.s32.totalorder %s28, 0
    %p123 = por %p121, %p122
    %s125 = sadd.s32 %s124, 1
    %p128 = scmp.eq.s32.totalorder %s22, 1
    %p129 = scmp.ne.s32.totalorder %s124, %s126
    %p130 = scmp.eq.s32.totalorder %s22, 0
    %p131 = por %p129, %p130
    %p132 = scmp.ne.s32.totalorder %s124, %s126
    %p133 = scmp.eq.s32.totalorder %s27, 1
    %p134 = por %p132, %p133
    %p135 = scmp.ne.s32.totalorder %s126, %s127
    %p136 = scmp.eq.s32.totalorder %s27, 0
    %p137 = por %p135, %p136
    %p138 = scmp.ne.s32.totalorder %s126, %s127
    %p139 = scmp.eq.s32.totalorder %s28, 1
    %p140 = por %p138, %p139
    %p142 = scmp.ne.s32.totalorder %s127, %s141
    %p143 = scmp.eq.s32.totalorder %s28, 0
    %p144 = por %p142, %p143
    %s146 = sadd.s32 %s145, 1
    %p149 = scmp.eq.s32.totalorder %s22, 1
    %p150 = scmp.ne.s32.totalorder %s145, %s147
    %p151 = scmp.eq.s32.totalorder %s22, 0
    %p152 = por %p150, %p151
    %p153 = scmp.ne.s32.totalorder %s145, %s147
    %p154 = scmp.eq.s32.totalorder %s27, 1
    %p155 = por %p153, %p154
    %p156 = scmp.ne.s32.totalorder %s147, %s148
    %p157 = scmp.eq.s32.totalorder %s27, 0
    %p158 = por %p156, %p157
    %p159 = scmp.ne.s32.totalorder %s147, %s148
    %p160 = scmp.eq.s32.totalorder %s28, 1
    %p161 = por %p159, %p160
    %p163 = scmp.ne.s32.totalorder %s148, %s162
    %p164 = scmp.eq.s32.totalorder %s28, 0
    %p165 = por %p163, %p164
    %s167 = sadd.s32 %s166, 1
    %p170 = scmp.eq.s32.totalorder %s22, 1
    %p171 = scmp.ne.s32.totalorder %s166, %s168
    %p172 = scmp.eq.s32.totalorder %s22, 0
    %p173 = por %p171, %p172
    %p174 = scmp.ne.s32.totalorder %s166, %s168
    %p175 = scmp.eq.s32.totalorder %s27, 1
    %p176 = por %p174, %p175
    %p177 = scmp.ne.s32.totalorder %s168, %s169
    %p178 = scmp.eq.s32.totalorder %s27, 0
    %p179 = por %p177, %p178
    %p180 = scmp.ne.s32.totalorder %s168, %s169
    %p181 = scmp.eq.s32.totalorder %s28, 1
    %p182 = por %p180, %p181
    %p184 = scmp.ne.s32.totalorder %s169, %s183
    %p185 = scmp.eq.s32.totalorder %s28, 0
    %p186 = por %p184, %p185
    %s188 = sadd.s32 %s187, 1
    %p191 = scmp.eq.s32.totalorder %s22, 1
    %p192 = scmp.ne.s32.totalorder %s187, %s189
    %p193 = scmp.eq.s32.totalorder %s22, 0
    %p194 = por %p192, %p193
    %p195 = scmp.ne.s32.totalorder %s187, %s189
    %p196 = scmp.eq.s32.totalorder %s27, 1
    %p197 = por %p195, %p196
    %p198 = scmp.ne.s32.totalorder %s189, %s190
    %p199 = scmp.eq.s32.totalorder %s27, 0
    %p200 = por %p198, %p199
    %p201 = scmp.ne.s32.totalorder %s189, %s190
    %p202 = scmp.eq.s32.totalorder %s28, 1
    %p203 = por %p201, %p202
    %p205 = scmp.ne.s32.totalorder %s190, %s204
    %p206 = scmp.eq.s32.totalorder %s28, 0
    %p207 = por %p205, %p206
    %s209 = sadd.s32 %s208, 1
    %p212 = scmp.eq.s32.totalorder %s22, 1
    %p213 = scmp.ne.s32.totalorder %s208, %s210
    %p214 = scmp.eq.s32.totalorder %s22, 0
    %p215 = por %p213, %p214
    %p216 = scmp.ne.s32.totalorder %s208, %s210
    %p217 = scmp.eq.s32.totalorder %s27, 1
    %p218 = por %p216, %p217
    %p219 = scmp.ne.s32.totalorder %s210, %s211
    %p220 = scmp.eq.s32.totalorder %s27, 0
    %p221 = por %p219, %p220
    %p222 = scmp.ne.s32.totalorder %s210, %s211
    %p223 = scmp.eq.s32.totalorder %s28, 1
    %p224 = por %p222, %p223
    %p226 = scmp.ne.s32.totalorder %s211, %s225
    %p227 = scmp.eq.s32.totalorder %s28, 0
    %p228 = por %p226, %p227
    %s230 = sadd.s32 %s229, 1
    %p233 = scmp.eq.s32.totalorder %s22, 1
    %p234 = scmp.ne.s32.totalorder %s229, %s231
    %p235 = scmp.eq.s32.totalorder %s22, 0
    %p236 = por %p234, %p235
    %p237 = scmp.ne.s32.totalorder %s229, %s231
    %p238 = scmp.eq.s32.totalorder %s27, 1
    %p239 = por %p237, %p238
    %p240 = scmp.ne.s32.totalorder %s231, %s232
    %p241 = scmp.eq.s32.totalorder %s27, 0
    %p242 = por %p240, %p241
    %p243 = scmp.ne.s32.totalorder %s231, %s232
    %p244 = scmp.eq.s32.totalorder %s28, 1
    %p245 = por %p243, %p244
    %p247 = scmp.ne.s32.totalorder %s232, %s246
    %p248 = scmp.eq.s32.totalorder %s28, 0
    %p249 = por %p247, %p248
    %s251 = sadd.s32 %s250, 1
    %p254 = scmp.eq.s32.totalorder %s22, 1
    %p255 = scmp.ne.s32.totalorder %s250, %s252
    %p256 = scmp.eq.s32.totalorder %s22, 0
    %p257 = por %p255, %p256
    %p258 = scmp.ne.s32.totalorder %s250, %s252
    %p259 = scmp.eq.s32.totalorder %s27, 1
    %p260 = por %p258, %p259
    %p261 = scmp.ne.s32.totalorder %s252, %s253
    %p262 = scmp.eq.s32.totalorder %s27, 0
    %p263 = por %p261, %p262
    %p264 = scmp.ne.s32.totalorder %s252, %s253
    %p265 = scmp.eq.s32.totalorder %s28, 1
    %p266 = por %p264, %p265
    %p268 = scmp.ne.s32.totalorder %s253, %s267
    %p269 = scmp.eq.s32.totalorder %s28, 0
    %p270 = por %p268, %p269
    %s272 = sadd.s32 %s271, 1
    %p275 = scmp.eq.s32.totalorder %s22, 1
    %p276 = scmp.ne.s32.totalorder %s271, %s273
    %p277 = scmp.eq.s32.totalorder %s22, 0
    %p278 = por %p276, %p277
    %p279 = scmp.ne.s32.totalorder %s271, %s273
    %p280 = scmp.eq.s32.totalorder %s27, 1
    %p281 = por %p279, %p280
    %p282 = scmp.ne.s32.totalorder %s273, %s274
    %p283 = scmp.eq.s32.totalorder %s27, 0
    %p284 = por %p282, %p283
    %p285 = scmp.ne.s32.totalorder %s273, %s274
    %p286 = scmp.eq.s32.totalorder %s28, 1
    %p287 = por %p285, %p286
    %p289 = scmp.ne.s32.totalorder %s274, %s288
    %p290 = scmp.eq.s32.totalorder %s28, 0
    %p291 = por %p289, %p290
    %s293 = sadd.s32 %s292, 1
    %p296 = scmp.eq.s32.totalorder %s22, 1
    %p297 = scmp.ne.s32.totalorder %s292, %s294
    %p298 = scmp.eq.s32.totalorder %s22, 0
    %p299 = por %p297, %p298
    %p300 = scmp.ne.s32.totalorder %s292, %s294
    %p301 = scmp.eq.s32.totalorder %s27, 1
    %p302 = por %p300, %p301
    %p303 = scmp.ne.s32.totalorder %s294, %s295
    %p304 = scmp.eq.s32.totalorder %s27, 0
    %p305 = por %p303, %p304
    %p306 = scmp.ne.s32.totalorder %s294, %s295
    %p307 = scmp.eq.s32.totalorder %s28, 1
    %p308 = por %p306, %p307
    %p310 = scmp.ne.s32.totalorder %s295, %s309
    %p311 = scmp.eq.s32.totalorder %s28, 0
    %p312 = por %p310, %p311
    %s314 = sadd.s32 %s313, 1
    %p317 = scmp.eq.s32.totalorder %s22, 1
    %p318 = scmp.ne.s32.totalorder %s313, %s315
    %p319 = scmp.eq.s32.totalorder %s22, 0
    %p320 = por %p318, %p319
    %p321 = scmp.ne.s32.totalorder %s313, %s315
    %p322 = scmp.eq.s32.totalorder %s27, 1
    %p323 = por %p321, %p322
    %p324 = scmp.ne.s32.totalorder %s315, %s316
    %p325 = scmp.eq.s32.totalorder %s27, 0
    %p326 = por %p324, %p325
    %p327 = scmp.ne.s32.totalorder %s315, %s316
    %p328 = scmp.eq.s32.totalorder %s28, 1
    %p329 = por %p327, %p328
    %p331 = scmp.ne.s32.totalorder %s316, %s330
    %p332 = scmp.eq.s32.totalorder %s28, 0
    %p333 = por %p331, %p332
    %s334 = ssub.s32 %s22, %s29
    %p335 = scmp.eq.s32.totalorder %s334, 0
    %s337 = sadd.s32 %s336, 1
    %s338 = scalar_select %p335, %s336, %s337
    %p341 = pneg %p335
    %p342 = scmp.eq.s32.totalorder %s22, 1
    %p343 = por %p341, %p342
    %p344 = scmp.ne.s32.totalorder %s336, %s339
    %p345 = scmp.eq.s32.totalorder %s22, 0
    %p346 = por %p344, %p345
    %p347 = scmp.ne.s32.totalorder %s336, %s339
    %p348 = scmp.eq.s32.totalorder %s27, 1
    %p349 = por %p347, %p348
    %p350 = scmp.ne.s32.totalorder %s339, %s340
    %p351 = scmp.eq.s32.totalorder %s27, 0
    %p352 = por %p350, %p351
    %p353 = scmp.ne.s32.totalorder %s339, %s340
    %p354 = scmp.eq.s32.totalorder %s28, 1
    %p355 = por %p353, %p354
    %p357 = scmp.ne.s32.totalorder %s340, %s356
    %p358 = scmp.eq.s32.totalorder %s28, 0
    %p359 = por %p357, %p358
    %s360 = ssub.s32 %s22, %s29
    %p361 = scmp.eq.s32.totalorder %s360, 0
    %s363 = sadd.s32 %s362, 1
    %s364 = scalar_select %p361, %s362, %s363
    %p367 = pneg %p361
    %p368 = scmp.eq.s32.totalorder %s22, 1
    %p369 = por %p367, %p368
    %p370 = scmp.ne.s32.totalorder %s362, %s365
    %p371 = scmp.eq.s32.totalorder %s22, 0
    %p372 = por %p370, %p371
    %p373 = scmp.ne.s32.totalorder %s362, %s365
    %p374 = scmp.eq.s32.totalorder %s27, 1
    %p375 = por %p373, %p374
    %p376 = scmp.ne.s32.totalorder %s365, %s366
    %p377 = scmp.eq.s32.totalorder %s27, 0
    %p378 = por %p376, %p377
    %p379 = scmp.ne.s32.totalorder %s365, %s366
    %p380 = scmp.eq.s32.totalorder %s28, 1
    %p381 = por %p379, %p380
    %p383 = scmp.ne.s32.totalorder %s366, %s382
    %p384 = scmp.eq.s32.totalorder %s28, 0
    %p385 = por %p383, %p384
    %p386 = scmp.le.s32.totalorder 1, %s22
    %p387 = scmp.lt.s32.totalorder %s22, 3
    %p388 = pnand %p386, %p387
    %p389 = pneg %p388
    // Predicated region
    $region9: #{mycdf_forward.1} parent=5 // pred_check
      _
    $region10: #{mycdf_forward.1} parent=5 // pred_check_branch
      %391 = sbr.rel (%p388) target = $region12
    $region11: #{mycdf_forward.1} parent=5 // pred_region
      %s392 = ssub.s32 %s22, 1
      // Predicated region
      $region13: #{mycdf_forward.1} parent=11 // pred_check
        %p393 = pneg %p95
      $region14: #{mycdf_forward.1} parent=11 // pred_check_branch
        %395 = sbr.rel (%p393) target = $region16
      $region15: #{mycdf_forward.1} parent=11 // pred_region
        _
      $region16: #{mycdf_forward.1} parent=11 // pred_fallthru
        _
      // Predicated region
      $region17: #{mycdf_forward.1} parent=11 // pred_check
        %p396 = pneg %p116
      $region18: #{mycdf_forward.1} parent=11 // pred_check_branch
        %398 = sbr.rel (%p396) target = $region20
      $region19: #{mycdf_forward.1} parent=11 // pred_region
        _
      $region20: #{mycdf_forward.1} parent=11 // pred_fallthru
        _
      // Predicated region
      $region21: #{mycdf_forward.1} parent=11 // pred_check
        %p399 = pneg %p137
      $region22: #{mycdf_forward.1} parent=11 // pred_check_branch
        %401 = sbr.rel (%p399) target = $region24
      $region23: #{mycdf_forward.1} parent=11 // pred_region
        _
      $region24: #{mycdf_forward.1} parent=11 // pred_fallthru
        _
      // Predicated region
      $region25: #{mycdf_forward.1} parent=11 // pred_check
        %p402 = pneg %p158
      $region26: #{mycdf_forward.1} parent=11 // pred_check_branch
        %404 = sbr.rel (%p402) target = $region28
      $region27: #{mycdf_forward.1} parent=11 // pred_region
        _
      $region28: #{mycdf_forward.1} parent=11 // pred_fallthru
        _
      // Predicated region
      $region29: #{mycdf_forward.1} parent=11 // pred_check
        %p405 = pneg %p179
      $region30: #{mycdf_forward.1} parent=11 // pred_check_branch
        %407 = sbr.rel (%p405) target = $region32
      $region31: #{mycdf_forward.1} parent=11 // pred_region
        _
      $region32: #{mycdf_forward.1} parent=11 // pred_fallthru
        _
      // Predicated region
      $region33: #{mycdf_forward.1} parent=11 // pred_check
        %p408 = pneg %p200
      $region34: #{mycdf_forward.1} parent=11 // pred_check_branch
        %410 = sbr.rel (%p408) target = $region36
      $region35: #{mycdf_forward.1} parent=11 // pred_region
        _
      $region36: #{mycdf_forward.1} parent=11 // pred_fallthru
        _
      // Predicated region
      $region37: #{mycdf_forward.1} parent=11 // pred_check
        %p411 = pneg %p221
      $region38: #{mycdf_forward.1} parent=11 // pred_check_branch
        %413 = sbr.rel (%p411) target = $region40
      $region39: #{mycdf_forward.1} parent=11 // pred_region
        _
      $region40: #{mycdf_forward.1} parent=11 // pred_fallthru
        _
      // Predicated region
      $region41: #{mycdf_forward.1} parent=11 // pred_check
        %p414 = pneg %p242
      $region42: #{mycdf_forward.1} parent=11 // pred_check_branch
        %416 = sbr.rel (%p414) target = $region44
      $region43: #{mycdf_forward.1} parent=11 // pred_region
        _
      $region44: #{mycdf_forward.1} parent=11 // pred_fallthru
        _
      // Predicated region
      $region45: #{mycdf_forward.1} parent=11 // pred_check
        %p417 = pneg %p263
      $region46: #{mycdf_forward.1} parent=11 // pred_check_branch
        %419 = sbr.rel (%p417) target = $region48
      $region47: #{mycdf_forward.1} parent=11 // pred_region
        _
      $region48: #{mycdf_forward.1} parent=11 // pred_fallthru
        _
      // Predicated region
      $region49: #{mycdf_forward.1} parent=11 // pred_check
        %p420 = pneg %p284
      $region50: #{mycdf_forward.1} parent=11 // pred_check_branch
        %422 = sbr.rel (%p420) target = $region52
      $region51: #{mycdf_forward.1} parent=11 // pred_region
        _
      $region52: #{mycdf_forward.1} parent=11 // pred_fallthru
        _
      // Predicated region
      $region53: #{mycdf_forward.1} parent=11 // pred_check
        %p423 = pneg %p305
      $region54: #{mycdf_forward.1} parent=11 // pred_check_branch
        %425 = sbr.rel (%p423) target = $region56
      $region55: #{mycdf_forward.1} parent=11 // pred_region
        _
      $region56: #{mycdf_forward.1} parent=11 // pred_fallthru
        _
      // Predicated region
      $region57: #{mycdf_forward.1} parent=11 // pred_check
        %p426 = pneg %p326
      $region58: #{mycdf_forward.1} parent=11 // pred_check_branch
        %428 = sbr.rel (%p426) target = $region60
      $region59: #{mycdf_forward.1} parent=11 // pred_region
        _
      $region60: #{mycdf_forward.1} parent=11 // pred_fallthru
        _
    $region12: #{mycdf_forward.1} parent=5 // pred_fallthru
      _
    %p429 = scmp.lt.s32.totalorder %s22, 2
    // Predicated region
    $region61: #{mycdf_forward.1} parent=5 // pred_check
      %p430 = pneg %p429
    $region62: #{mycdf_forward.1} parent=5 // pred_check_branch
      %432 = sbr.rel (%p430) target = $region64
    $region63: #{mycdf_forward.1} parent=5 // pred_region
      // Predicated region
      $region65: #{mycdf_forward.1} parent=63 // pred_check
        %p433 = pneg %p42
      $region66: #{mycdf_forward.1} parent=63 // pred_check_branch
        %435 = sbr.rel (%p433) target = $region68
      $region67: #{mycdf_forward.1} parent=63 // pred_region
        %p436 = scmp.lt.s32.totalorder %s22, 1
        %s437 = scalar_select %p436, %s22, 1
        %s438 = smul.addr %s437, 4
        %s439 = smul.addr %s438, 8
        %s440 = scalar_lea.vmem %s0, %s439
      $region68: #{mycdf_forward.1} parent=63 // pred_fallthru
        _
      // Predicated region
      $region69: #{mycdf_forward.1} parent=63 // pred_check
        %p441 = pneg %p68
      $region70: #{mycdf_forward.1} parent=63 // pred_check_branch
        %443 = sbr.rel (%p441) target = $region72
      $region71: #{mycdf_forward.1} parent=63 // pred_region
        %p444 = scmp.lt.s32.totalorder %s22, 1
        %s445 = scalar_select %p444, %s22, 1
        %s446 = smul.addr %s445, 10
        %s447 = smul.addr %s446, 8
        %s448 = scalar_lea.vmem %s1, %s447
      $region72: #{mycdf_forward.1} parent=63 // pred_fallthru
        _
    $region64: #{mycdf_forward.1} parent=5 // pred_fallthru
      _
    %p449 = scmp.le.s32.totalorder 1, %s22
    %p450 = scmp.lt.s32.totalorder %s22, 3
    %p451 = pnand %p449, %p450
    %p452 = pneg %p451
    // Predicated region
    $region73: #{mycdf_forward.1} parent=5 // pred_check
      _
    $region74: #{mycdf_forward.1} parent=5 // pred_check_branch
      %454 = sbr.rel (%p451) target = $region76
    $region75: #{mycdf_forward.1} parent=5 // pred_region
      %s455 = ssub.s32 %s22, 1
      %p456 = scmp.lt.s32.totalorder %s27, 1
      %s457 = scalar_select %p456, %s27, 1
      %s458 = smul.addr %s457, 4
      %s459 = smul.addr %s458, 8
      %s460 = scalar_lea.vmem %s0, %s459
      %p461 = pneg %p48
      %p462 = pneg %p45
      %p463 = scmp.lt.s32.totalorder %s27, 1
      %s464 = scalar_select %p463, %s27, 1
      %s465 = smul.addr %s464, 10
      %s466 = smul.addr %s465, 8
      %s467 = scalar_lea.vmem %s1, %s466
      %p468 = pneg %p74
      %p469 = pneg %p71
      %p470 = pneg %p95
      %p471 = pneg %p92
      %p472 = pneg %p116
      %p473 = pneg %p113
      %p474 = pneg %p137
      %p475 = pneg %p134
      %p476 = pneg %p158
      %p477 = pneg %p155
      %p478 = pneg %p179
      %p479 = pneg %p176
      %p480 = pneg %p200
      %p481 = pneg %p197
      %p482 = pneg %p221
      %p483 = pneg %p218
      %p484 = pneg %p242
      %p485 = pneg %p239
      %p486 = pneg %p263
      %p487 = pneg %p260
      %p488 = pneg %p284
      %p489 = pneg %p281
      %p490 = pneg %p305
      %p491 = pneg %p302
      %p492 = pneg %p326
      %p493 = pneg %p323
      %p494 = pneg %p352
      %p495 = pneg %p349
      %p496 = scmp.lt.s32.totalorder %s27, 1
      %s497 = scalar_select %p496, %s27, 1
      %s498 = smul.addr %s497, 4
      %s499 = smul.addr %s498, 8
      %s500 = scalar_lea.vmem %s14, %s499
      %p501 = pneg %p378
      %p502 = pneg %p375
      %p503 = scmp.lt.s32.totalorder %s27, 1
      %s504 = scalar_select %p503, %s27, 1
      %s505 = smul.addr %s504, 4
      %s506 = smul.addr %s505, 8
      %s507 = scalar_lea.vmem %s15, %s506
      %p508 = scmp.lt.s32.totalorder %s27, 1
      %s509 = scalar_select %p508, %s27, 1
      %s510 = smul.addr %s509, 4
      %s511 = smul.addr %s510, 8
      %s512 = scalar_lea.vmem %s0, %s511
      %p513 = scmp.lt.s32.totalorder %s27, 1
      %s514 = scalar_select %p513, %s27, 1
      %s515 = smul.addr %s514, 10
      %s516 = smul.addr %s515, 8
      %s517 = scalar_lea.vmem %s1, %s516
      %p518 = scmp.lt.s32.totalorder %s27, 1
      %s519 = scalar_select %p518, %s27, 1
      %s520 = smul.addr %s519, 4
      %s521 = smul.addr %s520, 8
      %s522 = scalar_lea.vmem %s14, %s521
      %p523 = scmp.lt.s32.totalorder %s27, 1
      %s524 = scalar_select %p523, %s27, 1
      %s525 = smul.addr %s524, 4
      %s526 = smul.addr %s525, 8
      %s527 = scalar_lea.vmem %s15, %s526
      %v528 = vld [vmem:[%s512] sm:$0xff]
      %v529 = vld [vmem:[%s512 + $0x8] sm:$0xff]
      %v530 = vld [vmem:[%s512 + $0x10] sm:$0xff]
      %v531 = vld [vmem:[%s512 + $0x18] sm:$0xff]
      %v532 = vld [vmem:[%s517] sm:$0xff]
      %v533 = vld [vmem:[%s517 + $0x8] sm:$0xff]
      %v534 = vld [vmem:[%s517 + $0x10] sm:$0xff]
      %v535 = vld [vmem:[%s517 + $0x18] sm:$0xff]
      %v536 = vld [vmem:[%s517 + $0x20] sm:$0xff]
      %v537 = vld [vmem:[%s517 + $0x28] sm:$0xff]
      %v538 = vld [vmem:[%s517 + $0x30] sm:$0xff]
      %v539 = vld [vmem:[%s517 + $0x38] sm:$0xff]
      %v540 = vld [vmem:[%s517 + $0x40] sm:$0xf]
      %v541 = vld [vmem:[%s517 + $0x48] sm:$0xf]
      %v542 = vld [vmem:[%s2] sm:$0xff]
      %v543 = vld [vmem:[%s2 + $0x8] sm:$0xff]
      %v544 = vld [vmem:[%s3] sm:$0xff]
      %v545 = vld [vmem:[%s3 + $0x8] sm:$0xff]
      %547 = vset.pattern.permute.xlu0 0
      %548 = vperm.xlu0 %547, %v544
      %v549 = vpop.permute.xlu0 %548
      %552 = vset.pattern.permute.xlu0 0
      %553 = vperm.xlu0 %552, %v545
      %v554 = vpop.permute.xlu0 %553
      %vm556 = vcmask 293888
      %v558 = vsel %vm556, %v542, 0
      %v561 = vsel %vm556, %v543, 0
      %vm563 = vcmask 1043456
      %v565 = vsel %vm563, %v540, 0
      %v568 = vsel %vm563, %v541, 0
      %570 = vmatprep.subr.mxu0 %v533
      %571 = vmatpush1.msra.mxu0 %v532
      %572 = vmatprep.subr.mxu0 %v535
      %573 = vmatpush1.msra.mxu0 %v534
      %574 = vmatprep.subr.mxu0 %v537
      %575 = vmatpush1.msra.mxu0 %v536
      %576 = vmatprep.subr.mxu0 %v539
      %577 = vmatpush1.msra.mxu0 %v538
      %578 = vmatprep.subr.mxu0 %v568
      %579 = vmatpush1.msra.mxu0 %v565
      %580 = vmatprep.subr.mxu0 0.0
      %581 = vmatpush1.msra.mxu0 0.0
      %582 = vmatprep.subr.mxu0 0.0
      %583 = vmatpush1.msra.mxu0 0.0
      %584 = vmatprep.subr.mxu0 0.0
      %585 = vmatpush1.msra.mxu0 0.0
      %586 = vmatprep.subr.mxu0 0.0
      %587 = vmatpush1.msra.mxu0 0.0
      %588 = vmatprep.subr.mxu0 0.0
      %589 = vmatpush1.msra.mxu0 0.0
      %590 = vmatprep.subr.mxu0 0.0
      %591 = vmatpush1.msra.mxu0 0.0
      %592 = vmatprep.subr.mxu0 0.0
      %593 = vmatpush1.msra.mxu0 0.0
      %594 = vmatprep.subr.mxu0 0.0
      %595 = vmatpush1.msra.mxu0 0.0
      %596 = vmatprep.subr.mxu0 0.0
      %597 = vmatpush1.msra.mxu0 0.0
      %598 = vmatprep.subr.mxu0 0.0
      %599 = vmatpush1.msra.mxu0 0.0
      %600 = vmatprep.subr.mxu0 0.0
      %601 = vmatpush1.msra.mxu0 0.0
      %602 = vmatprep.subr.mxu0 0.0
      %603 = vmatpush1.msra.mxu0 0.0
      %604 = vmatprep.subr.mxu0 0.0
      %605 = vmatpush1.msra.mxu0 0.0
      %606 = vmatprep.subr.mxu0 0.0
      %607 = vmatpush1.msra.mxu0 0.0
      %608 = vmatprep.subr.mxu0 0.0
      %609 = vmatpush1.msra.mxu0 0.0
      %610 = vmatprep.subr.mxu0 0.0
      %611 = vmatpush1.msra.mxu0 0.0
      %612 = vmatprep.subr.mxu0 0.0
      %613 = vmatpush1.msra.mxu0 0.0
      %614 = vmatprep.subr.mxu0 0.0
      %615 = vmatpush1.msra.mxu0 0.0
      %616 = vmatprep.subr.mxu0 0.0
      %617 = vmatpush1.msra.mxu0 0.0
      %618 = vmatprep.subr.mxu0 0.0
      %619 = vmatpush1.msra.mxu0 0.0
      %620 = vmatprep.subr.mxu0 0.0
      %621 = vmatpush1.msra.mxu0 0.0
      %622 = vmatprep.subr.mxu0 0.0
      %623 = vmatpush1.msra.mxu0 0.0
      %624 = vmatprep.subr.mxu0 0.0
      %625 = vmatpush1.msra.mxu0 0.0
      %626 = vmatprep.subr.mxu0 0.0
      %627 = vmatpush1.msra.mxu0 0.0
      %628 = vmatprep.subr.mxu0 0.0
      %629 = vmatpush1.msra.mxu0 0.0
      %630 = vmatprep.subr.mxu0 0.0
      %631 = vmatpush1.msra.mxu0 0.0
      %632 = vmatprep.subr.mxu0 0.0
      %633 = vmatpush1.msra.mxu0 0.0
      %634 = vmatprep.mubr.f32.mxu0 0.0
      %635 = vmatmul.mubr.f32.gmra.mrb[0].mxu0 %v558
      %v636 = vpop.f32.mrb[0].mxu0
      %v637 = vadd.f32 %v549, %v636
      %v638 = vpop.f32.mrb[0].mxu0
      %v639 = vadd.f32 %v549, %v638
      %640 = vmatprep.mubr.f32.mxu0 0.0
      %641 = vmatmul.mubr.f32.gmra.mrb[0].mxu0 %v561
      %v642 = vpop.f32.mrb[0].mxu0
      %v643 = vadd.f32 %v554, %v642
      %v644 = vpop.f32.mrb[0].mxu0
      %v645 = vadd.f32 %v554, %v644
      %646 = vdwg.mxu0
      %v647 = vmax.f32 %v637, 0.0
      %v648 = vmax.f32 %v639, 0.0
      %v649 = vmax.f32 %v643, 0.0
      %v650 = vmax.f32 %v645, 0.0
      %v651 = vmul.f32 %v528, %v647
      %v652 = vmul.f32 %v529, %v648
      %v653 = vmul.f32 %v530, %v649
      %v654 = vmul.f32 %v531, %v650
      %v655 = vld [vmem:[%s6] sm:$0xff]
      %v656 = vld [vmem:[%s6 + $0x8] sm:$0xff]
      %vm657 = vcmask 130048
      %v659 = vsel %vm657, %v655, 0
      %v662 = vsel %vm657, %v656, 0
      %664 = vmatprep.subr.mxu0 %v652
      %665 = vmatpush1.msra.mxu0 %v651
      %666 = vmatprep.subr.mxu0 %v654
      %667 = vmatpush1.msra.mxu0 %v653
      %668 = vmatprep.subr.mxu0 0.0
      %669 = vmatpush1.msra.mxu0 0.0
      %670 = vmatprep.subr.mxu0 0.0
      %671 = vmatpush1.msra.mxu0 0.0
      %672 = vmatprep.subr.mxu0 0.0
      %673 = vmatpush1.msra.mxu0 0.0
      %674 = vmatprep.subr.mxu0 0.0
      %675 = vmatpush1.msra.mxu0 0.0
      %676 = vmatprep.subr.mxu0 0.0
      %677 = vmatpush1.msra.mxu0 0.0
      %678 = vmatprep.subr.mxu0 0.0
      %679 = vmatpush1.msra.mxu0 0.0
      %680 = vmatprep.subr.mxu0 0.0
      %681 = vmatpush1.msra.mxu0 0.0
      %682 = vmatprep.subr.mxu0 0.0
      %683 = vmatpush1.msra.mxu0 0.0
      %684 = vmatprep.subr.mxu0 0.0
      %685 = vmatpush1.msra.mxu0 0.0
      %686 = vmatprep.subr.mxu0 0.0
      %687 = vmatpush1.msra.mxu0 0.0
      %688 = vmatprep.subr.mxu0 0.0
      %689 = vmatpush1.msra.mxu0 0.0
      %690 = vmatprep.subr.mxu0 0.0
      %691 = vmatpush1.msra.mxu0 0.0
      %692 = vmatprep.subr.mxu0 0.0
      %693 = vmatpush1.msra.mxu0 0.0
      %694 = vmatprep.subr.mxu0 0.0
      %695 = vmatpush1.msra.mxu0 0.0
      %696 = vmatprep.subr.mxu0 0.0
      %697 = vmatpush1.msra.mxu0 0.0
      %698 = vmatprep.subr.mxu0 0.0
      %699 = vmatpush1.msra.mxu0 0.0
      %700 = vmatprep.subr.mxu0 0.0
      %701 = vmatpush1.msra.mxu0 0.0
      %702 = vmatprep.subr.mxu0 0.0
      %703 = vmatpush1.msra.mxu0 0.0
      %704 = vmatprep.subr.mxu0 0.0
      %705 = vmatpush1.msra.mxu0 0.0
      %706 = vmatprep.subr.mxu0 0.0
      %707 = vmatpush1.msra.mxu0 0.0
      %708 = vmatprep.subr.mxu0 0.0
      %709 = vmatpush1.msra.mxu0 0.0
      %710 = vmatprep.subr.mxu0 0.0
      %711 = vmatpush1.msra.mxu0 0.0
      %712 = vmatprep.subr.mxu0 0.0
      %713 = vmatpush1.msra.mxu0 0.0
      %714 = vmatprep.subr.mxu0 0.0
      %715 = vmatpush1.msra.mxu0 0.0
      %716 = vmatprep.subr.mxu0 0.0
      %717 = vmatpush1.msra.mxu0 0.0
      %718 = vmatprep.subr.mxu0 0.0
      %719 = vmatpush1.msra.mxu0 0.0
      %720 = vmatprep.subr.mxu0 0.0
      %721 = vmatpush1.msra.mxu0 0.0
      %722 = vmatprep.subr.mxu0 0.0
      %723 = vmatpush1.msra.mxu0 0.0
      %724 = vmatprep.subr.mxu0 0.0
      %725 = vmatpush1.msra.mxu0 0.0
      %726 = vmatprep.subr.mxu0 0.0
      %727 = vmatpush1.msra.mxu0 0.0
      %728 = vmatprep.mubr.f32.mxu0 0.0
      %729 = vmatmul.mubr.f32.gmra.mrb[0].mxu0 %v659
      %v730 = vpop.f32.mrb[0].mxu0
      %v731 = vadd.f32 0.0, %v730
      %v732 = vpop.f32.mrb[0].mxu0
      %v733 = vadd.f32 0.0, %v732
      %734 = vmatprep.mubr.f32.mxu0 0.0
      %735 = vmatmul.mubr.f32.gmra.mrb[0].mxu0 %v662
      %v736 = vpop.f32.mrb[0].mxu0
      %v737 = vadd.f32 0.0, %v736
      %v738 = vpop.f32.mrb[0].mxu0
      %v739 = vadd.f32 0.0, %v738
      %740 = vdwg.mxu0
      %v741 = vld [vmem:[%s7] sm:$0xff]
      %v742 = vld [vmem:[%s7 + $0x8] sm:$0xff]
      %v744 = vsel %vm657, %v741, 0
      %v747 = vsel %vm657, %v742, 0
      %749 = vmatprep.subr.mxu0 %v652
      %750 = vmatpush1.msra.mxu0 %v651
      %751 = vmatprep.subr.mxu0 %v654
      %752 = vmatpush1.msra.mxu0 %v653
      %753 = vmatprep.subr.mxu0 0.0
      %754 = vmatpush1.msra.mxu0 0.0
      %755 = vmatprep.subr.mxu0 0.0
      %756 = vmatpush1.msra.mxu0 0.0
      %757 = vmatprep.subr.mxu0 0.0
      %758 = vmatpush1.msra.mxu0 0.0
      %759 = vmatprep.subr.mxu0 0.0
      %760 = vmatpush1.msra.mxu0 0.0
      %761 = vmatprep.subr.mxu0 0.0
      %762 = vmatpush1.msra.mxu0 0.0
      %763 = vmatprep.subr.mxu0 0.0
      %764 = vmatpush1.msra.mxu0 0.0
      %765 = vmatprep.subr.mxu0 0.0
      %766 = vmatpush1.msra.mxu0 0.0
      %767 = vmatprep.subr.mxu0 0.0
      %768 = vmatpush1.msra.mxu0 0.0
      %769 = vmatprep.subr.mxu0 0.0
      %770 = vmatpush1.msra.mxu0 0.0
      %771 = vmatprep.subr.mxu0 0.0
      %772 = vmatpush1.msra.mxu0 0.0
      %773 = vmatprep.subr.mxu0 0.0
      %774 = vmatpush1.msra.mxu0 0.0
      %775 = vmatprep.subr.mxu0 0.0
      %776 = vmatpush1.msra.mxu0 0.0
      %777 = vmatprep.subr.mxu0 0.0
      %778 = vmatpush1.msra.mxu0 0.0
      %779 = vmatprep.subr.mxu0 0.0
      %780 = vmatpush1.msra.mxu0 0.0
      %781 = vmatprep.subr.mxu0 0.0
      %782 = vmatpush1.msra.mxu0 0.0
      %783 = vmatprep.subr.mxu0 0.0
      %784 = vmatpush1.msra.mxu0 0.0
      %785 = vmatprep.subr.mxu0 0.0
      %786 = vmatpush1.msra.mxu0 0.0
      %787 = vmatprep.subr.mxu0 0.0
      %788 = vmatpush1.msra.mxu0 0.0
      %789 = vmatprep.subr.mxu0 0.0
      %790 = vmatpush1.msra.mxu0 0.0
      %791 = vmatprep.subr.mxu0 0.0
      %792 = vmatpush1.msra.mxu0 0.0
      %793 = vmatprep.subr.mxu0 0.0
      %794 = vmatpush1.msra.mxu0 0.0
      %795 = vmatprep.subr.mxu0 0.0
      %796 = vmatpush1.msra.mxu0 0.0
      %797 = vmatprep.subr.mxu0 0.0
      %798 = vmatpush1.msra.mxu0 0.0
      %799 = vmatprep.subr.mxu0 0.0
      %800 = vmatpush1.msra.mxu0 0.0
      %801 = vmatprep.subr.mxu0 0.0
      %802 = vmatpush1.msra.mxu0 0.0
      %803 = vmatprep.subr.mxu0 0.0
      %804 = vmatpush1.msra.mxu0 0.0
      %805 = vmatprep.subr.mxu0 0.0
      %806 = vmatpush1.msra.mxu0 0.0
      %807 = vmatprep.subr.mxu0 0.0
      %808 = vmatpush1.msra.mxu0 0.0
      %809 = vmatprep.subr.mxu0 0.0
      %810 = vmatpush1.msra.mxu0 0.0
      %811 = vmatprep.subr.mxu0 0.0
      %812 = vmatpush1.msra.mxu0 0.0
      %813 = vmatprep.mubr.f32.mxu0 0.0
      %814 = vmatmul.mubr.f32.gmra.mrb[0].mxu0 %v744
      %v815 = vpop.f32.mrb[0].mxu0
      %v816 = vadd.f32 0.0, %v815
      %v817 = vpop.f32.mrb[0].mxu0
      %v818 = vadd.f32 0.0, %v817
      %819 = vmatprep.mubr.f32.mxu0 0.0
      %820 = vmatmul.mubr.f32.gmra.mrb[0].mxu0 %v747
      %v821 = vpop.f32.mrb[0].mxu0
      %v822 = vadd.f32 0.0, %v821
      %v823 = vpop.f32.mrb[0].mxu0
      %v824 = vadd.f32 0.0, %v823
      %825 = vdwg.mxu0
      %v826 = vld [vmem:[%s10] sm:$0xff]
      %v827 = vld [vmem:[%s10 + $0x8] sm:$0xff]
      %v828 = vld [vmem:[%s10 + $0x10] sm:$0xff]
      %v829 = vld [vmem:[%s10 + $0x18] sm:$0xff]
      %v830 = vld [vmem:[%s10 + $0x20] sm:$0xff]
      %v831 = vld [vmem:[%s10 + $0x28] sm:$0xff]
      %v832 = vld [vmem:[%s10 + $0x30] sm:$0xff]
      %v833 = vld [vmem:[%s10 + $0x38] sm:$0xff]
      %v834 = vld [vmem:[%s10 + $0x40] sm:$0xff]
      %v835 = vld [vmem:[%s10 + $0x48] sm:$0xff]
      %v836 = vld [vmem:[%s10 + $0x50] sm:$0xff]
      %v837 = vld [vmem:[%s10 + $0x58] sm:$0xff]
      %v838 = vld [vmem:[%s10 + $0x60] sm:$0xff]
      %v839 = vld [vmem:[%s10 + $0x68] sm:$0xff]
      %v840 = vld [vmem:[%s10 + $0x70] sm:$0xff]
      %v841 = vld [vmem:[%s10 + $0x78] sm:$0xff]
      %v842 = vld [vmem:[%s10 + $0x80] sm:$0xff]
      %v843 = vld [vmem:[%s10 + $0x88] sm:$0xff]
      %v844 = vld [vmem:[%s10 + $0x90] sm:$0xff]
      %v845 = vld [vmem:[%s10 + $0x98] sm:$0xff]
      %v846 = vld [vmem:[%s10 + $0xa0] sm:$0xff]
      %v847 = vld [vmem:[%s10 + $0xa8] sm:$0xff]
      %v848 = vld [vmem:[%s10 + $0xb0] sm:$0xff]
      %v849 = vld [vmem:[%s10 + $0xb8] sm:$0xff]
      %v850 = vld [vmem:[%s10 + $0xc0] sm:$0xff]
      %v851 = vld [vmem:[%s10 + $0xc8] sm:$0xff]
      %v852 = vld [vmem:[%s10 + $0xd0] sm:$0xff]
      %v853 = vld [vmem:[%s10 + $0xd8] sm:$0xff]
      %v854 = vld [vmem:[%s10 + $0xe0] sm:$0xff]
      %v855 = vld [vmem:[%s10 + $0xe8] sm:$0xff]
      %v856 = vld [vmem:[%s10 + $0xf0] sm:$0xff]
      %v857 = vld [vmem:[%s10 + $0xf8] sm:$0xff]
      %v858 = vld [vmem:[%s10 + $0x100] sm:$0xff]
      %v859 = vld [vmem:[%s10 + $0x108] sm:$0xff]
      %v860 = vld [vmem:[%s10 + $0x110] sm:$0xff]
      %v861 = vld [vmem:[%s10 + $0x118] sm:$0xff]
      %v862 = vld [vmem:[%s10 + $0x120] sm:$0xff]
      %v863 = vld [vmem:[%s10 + $0x128] sm:$0xff]
      %v864 = vld [vmem:[%s10 + $0x130] sm:$0xff]
      %v865 = vld [vmem:[%s10 + $0x138] sm:$0xff]
      %v866 = vld [vmem:[%s10 + $0x140] sm:$0xff]
      %v867 = vld [vmem:[%s10 + $0x148] sm:$0xff]
      %v868 = vld [vmem:[%s10 + $0x150] sm:$0xff]
      %v869 = vld [vmem:[%s10 + $0x158] sm:$0xff]
      %v870 = vld [vmem:[%s10 + $0x160] sm:$0xff]
      %v871 = vld [vmem:[%s10 + $0x168] sm:$0xff]
      %v872 = vld [vmem:[%s10 + $0x170] sm:$0xff]
      %v873 = vld [vmem:[%s10 + $0x178] sm:$0xff]
      %v874 = vld [vmem:[%s10 + $0x180] sm:$0xff]
      %v875 = vld [vmem:[%s10 + $0x188] sm:$0xff]
      %v876 = vld [vmem:[%s10 + $0x190] sm:$0xff]
      %v877 = vld [vmem:[%s10 + $0x198] sm:$0xff]
      %v878 = vld [vmem:[%s10 + $0x1a0] sm:$0xff]
      %v879 = vld [vmem:[%s10 + $0x1a8] sm:$0xff]
      %v880 = vld [vmem:[%s10 + $0x1b0] sm:$0xff]
      %v881 = vld [vmem:[%s10 + $0x1b8] sm:$0xff]
      %v882 = vld [vmem:[%s10 + $0x1c0] sm:$0xff]
      %v883 = vld [vmem:[%s10 + $0x1c8] sm:$0xff]
      %v884 = vld [vmem:[%s10 + $0x1d0] sm:$0xff]
      %v885 = vld [vmem:[%s10 + $0x1d8] sm:$0xff]
      %v886 = vld [vmem:[%s10 + $0x1e0] sm:$0xff]
      %v887 = vld [vmem:[%s10 + $0x1e8] sm:$0xff]
      %v888 = vld [vmem:[%s10 + $0x1f0] sm:$0xff]
      %v889 = vld [vmem:[%s10 + $0x1f8] sm:$0xff]
      %890 = vmatprep.subr.mxu0 %v827
      %891 = vmatpush1.msra.mxu0 %v826
      %892 = vmatprep.subr.mxu0 %v829
      %893 = vmatpush1.msra.mxu0 %v828
      %894 = vmatprep.subr.mxu0 %v831
      %895 = vmatpush1.msra.mxu0 %v830
      %896 = vmatprep.subr.mxu0 %v833
      %897 = vmatpush1.msra.mxu0 %v832
      %898 = vmatprep.subr.mxu0 %v835
      %899 = vmatpush1.msra.mxu0 %v834
      %900 = vmatprep.subr.mxu0 %v837
      %901 = vmatpush1.msra.mxu0 %v836
      %902 = vmatprep.subr.mxu0 %v839
      %903 = vmatpush1.msra.mxu0 %v838
      %904 = vmatprep.subr.mxu0 %v841
      %905 = vmatpush1.msra.mxu0 %v840
      %906 = vmatprep.subr.mxu0 %v843
      %907 = vmatpush1.msra.mxu0 %v842
      %908 = vmatprep.subr.mxu0 %v845
      %909 = vmatpush1.msra.mxu0 %v844
      %910 = vmatprep.subr.mxu0 %v847
      %911 = vmatpush1.msra.mxu0 %v846
      %912 = vmatprep.subr.mxu0 %v849
      %913 = vmatpush1.msra.mxu0 %v848
      %914 = vmatprep.subr.mxu0 %v851
      %915 = vmatpush1.msra.mxu0 %v850
      %916 = vmatprep.subr.mxu0 %v853
      %917 = vmatpush1.msra.mxu0 %v852
      %918 = vmatprep.subr.mxu0 %v855
      %919 = vmatpush1.msra.mxu0 %v854
      %920 = vmatprep.subr.mxu0 %v857
      %921 = vmatpush1.msra.mxu0 %v856
      %922 = vmatprep.subr.mxu0 %v859
      %923 = vmatpush1.msra.mxu0 %v858
      %924 = vmatprep.subr.mxu0 %v861
      %925 = vmatpush1.msra.mxu0 %v860
      %926 = vmatprep.subr.mxu0 %v863
      %927 = vmatpush1.msra.mxu0 %v862
      %928 = vmatprep.subr.mxu0 %v865
      %929 = vmatpush1.msra.mxu0 %v864
      %930 = vmatprep.subr.mxu0 %v867
      %931 = vmatpush1.msra.mxu0 %v866
      %932 = vmatprep.subr.mxu0 %v869
      %933 = vmatpush1.msra.mxu0 %v868
      %934 = vmatprep.subr.mxu0 %v871
      %935 = vmatpush1.msra.mxu0 %v870
      %936 = vmatprep.subr.mxu0 %v873
      %937 = vmatpush1.msra.mxu0 %v872
      %938 = vmatprep.subr.mxu0 %v875
      %939 = vmatpush1.msra.mxu0 %v874
      %940 = vmatprep.subr.mxu0 %v877
      %941 = vmatpush1.msra.mxu0 %v876
      %942 = vmatprep.subr.mxu0 %v879
      %943 = vmatpush1.msra.mxu0 %v878
      %944 = vmatprep.subr.mxu0 %v881
      %945 = vmatpush1.msra.mxu0 %v880
      %946 = vmatprep.subr.mxu0 %v883
      %947 = vmatpush1.msra.mxu0 %v882
      %948 = vmatprep.subr.mxu0 %v885
      %949 = vmatpush1.msra.mxu0 %v884
      %950 = vmatprep.subr.mxu0 %v887
      %951 = vmatpush1.msra.mxu0 %v886
      %952 = vmatprep.subr.mxu0 %v889
      %953 = vmatpush1.msra.mxu0 %v888
      %954 = vmatprep.mubr.f32.mxu0 %v733
      %955 = vmatmul.mubr.f32.gmra.mrb[0].mxu0 %v731
      %v956 = vpop.f32.mrb[0].mxu0
      %v957 = vadd.f32 0.0, %v956
      %v958 = vpop.f32.mrb[0].mxu0
      %v959 = vadd.f32 0.0, %v958
      %960 = vmatprep.mubr.f32.mxu0 %v739
      %961 = vmatmul.mubr.f32.gmra.mrb[0].mxu0 %v737
      %v962 = vpop.f32.mrb[0].mxu0
      %v963 = vadd.f32 0.0, %v962
      %v964 = vpop.f32.mrb[0].mxu0
      %v965 = vadd.f32 0.0, %v964
      %966 = vdwg.mxu0
      %v967 = vld [vmem:[%s11] sm:$0xff]
      %v968 = vld [vmem:[%s11 + $0x8] sm:$0xff]
      %v969 = vld [vmem:[%s11 + $0x10] sm:$0xff]
      %v970 = vld [vmem:[%s11 + $0x18] sm:$0xff]
      %v971 = vld [vmem:[%s11 + $0x20] sm:$0xff]
      %v972 = vld [vmem:[%s11 + $0x28] sm:$0xff]
      %v973 = vld [vmem:[%s11 + $0x30] sm:$0xff]
      %v974 = vld [vmem:[%s11 + $0x38] sm:$0xff]
      %v975 = vld [vmem:[%s11 + $0x40] sm:$0xff]
      %v976 = vld [vmem:[%s11 + $0x48] sm:$0xff]
      %v977 = vld [vmem:[%s11 + $0x50] sm:$0xff]
      %v978 = vld [vmem:[%s11 + $0x58] sm:$0xff]
      %v979 = vld [vmem:[%s11 + $0x60] sm:$0xff]
      %v980 = vld [vmem:[%s11 + $0x68] sm:$0xff]
      %v981 = vld [vmem:[%s11 + $0x70] sm:$0xff]
      %v982 = vld [vmem:[%s11 + $0x78] sm:$0xff]
      %v983 = vld [vmem:[%s11 + $0x80] sm:$0xff]
      %v984 = vld [vmem:[%s11 + $0x88] sm:$0xff]
      %v985 = vld [vmem:[%s11 + $0x90] sm:$0xff]
      %v986 = vld [vmem:[%s11 + $0x98] sm:$0xff]
      %v987 = vld [vmem:[%s11 + $0xa0] sm:$0xff]
      %v988 = vld [vmem:[%s11 + $0xa8] sm:$0xff]
      %v989 = vld [vmem:[%s11 + $0xb0] sm:$0xff]
      %v990 = vld [vmem:[%s11 + $0xb8] sm:$0xff]
      %v991 = vld [vmem:[%s11 + $0xc0] sm:$0xff]
      %v992 = vld [vmem:[%s11 + $0xc8] sm:$0xff]
      %v993 = vld [vmem:[%s11 + $0xd0] sm:$0xff]
      %v994 = vld [vmem:[%s11 + $0xd8] sm:$0xff]
      %v995 = vld [vmem:[%s11 + $0xe0] sm:$0xff]
      %v996 = vld [vmem:[%s11 + $0xe8] sm:$0xff]
      %v997 = vld [vmem:[%s11 + $0xf0] sm:$0xff]
      %v998 = vld [vmem:[%s11 + $0xf8] sm:$0xff]
      %v999 = vld [vmem:[%s11 + $0x100] sm:$0xff]
      %v1000 = vld [vmem:[%s11 + $0x108] sm:$0xff]
      %v1001 = vld [vmem:[%s11 + $0x110] sm:$0xff]
      %v1002 = vld [vmem:[%s11 + $0x118] sm:$0xff]
      %v1003 = vld [vmem:[%s11 + $0x120] sm:$0xff]
      %v1004 = vld [vmem:[%s11 + $0x128] sm:$0xff]
      %v1005 = vld [vmem:[%s11 + $0x130] sm:$0xff]
      %v1006 = vld [vmem:[%s11 + $0x138] sm:$0xff]
      %v1007 = vld [vmem:[%s11 + $0x140] sm:$0xff]
      %v1008 = vld [vmem:[%s11 + $0x148] sm:$0xff]
      %v1009 = vld [vmem:[%s11 + $0x150] sm:$0xff]
      %v1010 = vld [vmem:[%s11 + $0x158] sm:$0xff]
      %v1011 = vld [vmem:[%s11 + $0x160] sm:$0xff]
      %v1012 = vld [vmem:[%s11 + $0x168] sm:$0xff]
      %v1013 = vld [vmem:[%s11 + $0x170] sm:$0xff]
      %v1014 = vld [vmem:[%s11 + $0x178] sm:$0xff]
      %v1015 = vld [vmem:[%s11 + $0x180] sm:$0xff]
      %v1016 = vld [vmem:[%s11 + $0x188] sm:$0xff]
      %v1017 = vld [vmem:[%s11 + $0x190] sm:$0xff]
      %v1018 = vld [vmem:[%s11 + $0x198] sm:$0xff]
      %v1019 = vld [vmem:[%s11 + $0x1a0] sm:$0xff]
      %v1020 = vld [vmem:[%s11 + $0x1a8] sm:$0xff]
      %v1021 = vld [vmem:[%s11 + $0x1b0] sm:$0xff]
      %v1022 = vld [vmem:[%s11 + $0x1b8] sm:$0xff]
      %v1023 = vld [vmem:[%s11 + $0x1c0] sm:$0xff]
      %v1024 = vld [vmem:[%s11 + $0x1c8] sm:$0xff]
      %v1025 = vld [vmem:[%s11 + $0x1d0] sm:$0xff]
      %v1026 = vld [vmem:[%s11 + $0x1d8] sm:$0xff]
      %v1027 = vld [vmem:[%s11 + $0x1e0] sm:$0xff]
      %v1028 = vld [vmem:[%s11 + $0x1e8] sm:$0xff]
      %v1029 = vld [vmem:[%s11 + $0x1f0] sm:$0xff]
      %v1030 = vld [vmem:[%s11 + $0x1f8] sm:$0xff]
      %1031 = vmatprep.subr.mxu0 %v968
      %1032 = vmatpush1.msra.mxu0 %v967
      %1033 = vmatprep.subr.mxu0 %v970
      %1034 = vmatpush1.msra.mxu0 %v969
      %1035 = vmatprep.subr.mxu0 %v972
      %1036 = vmatpush1.msra.mxu0 %v971
      %1037 = vmatprep.subr.mxu0 %v974
      %1038 = vmatpush1.msra.mxu0 %v973
      %1039 = vmatprep.subr.mxu0 %v976
      %1040 = vmatpush1.msra.mxu0 %v975
      %1041 = vmatprep.subr.mxu0 %v978
      %1042 = vmatpush1.msra.mxu0 %v977
      %1043 = vmatprep.subr.mxu0 %v980
      %1044 = vmatpush1.msra.mxu0 %v979
      %1045 = vmatprep.subr.mxu0 %v982
      %1046 = vmatpush1.msra.mxu0 %v981
      %1047 = vmatprep.subr.mxu0 %v984
      %1048 = vmatpush1.msra.mxu0 %v983
      %1049 = vmatprep.subr.mxu0 %v986
      %1050 = vmatpush1.msra.mxu0 %v985
      %1051 = vmatprep.subr.mxu0 %v988
      %1052 = vmatpush1.msra.mxu0 %v987
      %1053 = vmatprep.subr.mxu0 %v990
      %1054 = vmatpush1.msra.mxu0 %v989
      %1055 = vmatprep.subr.mxu0 %v992
      %1056 = vmatpush1.msra.mxu0 %v991
      %1057 = vmatprep.subr.mxu0 %v994
      %1058 = vmatpush1.msra.mxu0 %v993
      %1059 = vmatprep.subr.mxu0 %v996
      %1060 = vmatpush1.msra.mxu0 %v995
      %1061 = vmatprep.subr.mxu0 %v998
      %1062 = vmatpush1.msra.mxu0 %v997
      %1063 = vmatprep.subr.mxu0 %v1000
      %1064 = vmatpush1.msra.mxu0 %v999
      %1065 = vmatprep.subr.mxu0 %v1002
      %1066 = vmatpush1.msra.mxu0 %v1001
      %1067 = vmatprep.subr.mxu0 %v1004
      %1068 = vmatpush1.msra.mxu0 %v1003
      %1069 = vmatprep.subr.mxu0 %v1006
      %1070 = vmatpush1.msra.mxu0 %v1005
      %1071 = vmatprep.subr.mxu0 %v1008
      %1072 = vmatpush1.msra.mxu0 %v1007
      %1073 = vmatprep.subr.mxu0 %v1010
      %1074 = vmatpush1.msra.mxu0 %v1009
      %1075 = vmatprep.subr.mxu0 %v1012
      %1076 = vmatpush1.msra.mxu0 %v1011
      %1077 = vmatprep.subr.mxu0 %v1014
      %1078 = vmatpush1.msra.mxu0 %v1013
      %1079 = vmatprep.subr.mxu0 %v1016
      %1080 = vmatpush1.msra.mxu0 %v1015
      %1081 = vmatprep.subr.mxu0 %v1018
      %1082 = vmatpush1.msra.mxu0 %v1017
      %1083 = vmatprep.subr.mxu0 %v1020
      %1084 = vmatpush1.msra.mxu0 %v1019
      %1085 = vmatprep.subr.mxu0 %v1022
      %1086 = vmatpush1.msra.mxu0 %v1021
      %1087 = vmatprep.subr.mxu0 %v1024
      %1088 = vmatpush1.msra.mxu0 %v1023
      %1089 = vmatprep.subr.mxu0 %v1026
      %1090 = vmatpush1.msra.mxu0 %v1025
      %1091 = vmatprep.subr.mxu0 %v1028
      %1092 = vmatpush1.msra.mxu0 %v1027
      %1093 = vmatprep.subr.mxu0 %v1030
      %1094 = vmatpush1.msra.mxu0 %v1029
      %1095 = vmatprep.mubr.f32.mxu0 %v818
      %1096 = vmatmul.mubr.f32.gmra.mrb[0].mxu0 %v816
      %v1097 = vpop.f32.mrb[0].mxu0
      %v1098 = vadd.f32 0.0, %v1097
      %v1099 = vpop.f32.mrb[0].mxu0
      %v1100 = vadd.f32 0.0, %v1099
      %1101 = vmatprep.mubr.f32.mxu0 %v824
      %1102 = vmatmul.mubr.f32.gmra.mrb[0].mxu0 %v822
      %v1103 = vpop.f32.mrb[0].mxu0
      %v1104 = vadd.f32 0.0, %v1103
      %v1105 = vpop.f32.mrb[0].mxu0
      %v1106 = vadd.f32 0.0, %v1105
      %1107 = vdwg.mxu0
      %v1108 = vsub.f32 %v957, %v1098
      %v1109 = vsub.f32 %v959, %v1100
      %v1110 = vsub.f32 %v963, %v1104
      %v1111 = vsub.f32 %v965, %v1106
      %1112 = vmatprep.subr.mxu0 %v827
      %1113 = vmatpush1.msra.mxu0 %v826
      %1114 = vmatprep.subr.mxu0 %v829
      %1115 = vmatpush1.msra.mxu0 %v828
      %1116 = vmatprep.subr.mxu0 %v831
      %1117 = vmatpush1.msra.mxu0 %v830
      %1118 = vmatprep.subr.mxu0 %v833
      %1119 = vmatpush1.msra.mxu0 %v832
      %1120 = vmatprep.subr.mxu0 %v835
      %1121 = vmatpush1.msra.mxu0 %v834
      %1122 = vmatprep.subr.mxu0 %v837
      %1123 = vmatpush1.msra.mxu0 %v836
      %1124 = vmatprep.subr.mxu0 %v839
      %1125 = vmatpush1.msra.mxu0 %v838
      %1126 = vmatprep.subr.mxu0 %v841
      %1127 = vmatpush1.msra.mxu0 %v840
      %1128 = vmatprep.subr.mxu0 %v843
      %1129 = vmatpush1.msra.mxu0 %v842
      %1130 = vmatprep.subr.mxu0 %v845
      %1131 = vmatpush1.msra.mxu0 %v844
      %1132 = vmatprep.subr.mxu0 %v847
      %1133 = vmatpush1.msra.mxu0 %v846
      %1134 = vmatprep.subr.mxu0 %v849
      %1135 = vmatpush1.msra.mxu0 %v848
      %1136 = vmatprep.subr.mxu0 %v851
      %1137 = vmatpush1.msra.mxu0 %v850
      %1138 = vmatprep.subr.mxu0 %v853
      %1139 = vmatpush1.msra.mxu0 %v852
      %1140 = vmatprep.subr.mxu0 %v855
      %1141 = vmatpush1.msra.mxu0 %v854
      %1142 = vmatprep.subr.mxu0 %v857
      %1143 = vmatpush1.msra.mxu0 %v856
      %1144 = vmatprep.subr.mxu0 %v859
      %1145 = vmatpush1.msra.mxu0 %v858
      %1146 = vmatprep.subr.mxu0 %v861
      %1147 = vmatpush1.msra.mxu0 %v860
      %1148 = vmatprep.subr.mxu0 %v863
      %1149 = vmatpush1.msra.mxu0 %v862
      %1150 = vmatprep.subr.mxu0 %v865
      %1151 = vmatpush1.msra.mxu0 %v864
      %1152 = vmatprep.subr.mxu0 %v867
      %1153 = vmatpush1.msra.mxu0 %v866
      %1154 = vmatprep.subr.mxu0 %v869
      %1155 = vmatpush1.msra.mxu0 %v868
      %1156 = vmatprep.subr.mxu0 %v871
      %1157 = vmatpush1.msra.mxu0 %v870
      %1158 = vmatprep.subr.mxu0 %v873
      %1159 = vmatpush1.msra.mxu0 %v872
      %1160 = vmatprep.subr.mxu0 %v875
      %1161 = vmatpush1.msra.mxu0 %v874
      %1162 = vmatprep.subr.mxu0 %v877
      %1163 = vmatpush1.msra.mxu0 %v876
      %1164 = vmatprep.subr.mxu0 %v879
      %1165 = vmatpush1.msra.mxu0 %v878
      %1166 = vmatprep.subr.mxu0 %v881
      %1167 = vmatpush1.msra.mxu0 %v880
      %1168 = vmatprep.subr.mxu0 %v883
      %1169 = vmatpush1.msra.mxu0 %v882
      %1170 = vmatprep.subr.mxu0 %v885
      %1171 = vmatpush1.msra.mxu0 %v884
      %1172 = vmatprep.subr.mxu0 %v887
      %1173 = vmatpush1.msra.mxu0 %v886
      %1174 = vmatprep.subr.mxu0 %v889
      %1175 = vmatpush1.msra.mxu0 %v888
      %1176 = vmatprep.mubr.f32.mxu0 %v818
      %1177 = vmatmul.mubr.f32.gmra.mrb[0].mxu0 %v816
      %v1178 = vpop.f32.mrb[0].mxu0
      %v1179 = vadd.f32 0.0, %v1178
      %v1180 = vpop.f32.mrb[0].mxu0
      %v1181 = vadd.f32 0.0, %v1180
      %1182 = vmatprep.mubr.f32.mxu0 %v824
      %1183 = vmatmul.mubr.f32.gmra.mrb[0].mxu0 %v822
      %v1184 = vpop.f32.mrb[0].mxu0
      %v1185 = vadd.f32 0.0, %v1184
      %v1186 = vpop.f32.mrb[0].mxu0
      %v1187 = vadd.f32 0.0, %v1186
      %1188 = vdwg.mxu0
      %1189 = vmatprep.subr.mxu0 %v968
      %1190 = vmatpush1.msra.mxu0 %v967
      %1191 = vmatprep.subr.mxu0 %v970
      %1192 = vmatpush1.msra.mxu0 %v969
      %1193 = vmatprep.subr.mxu0 %v972
      %1194 = vmatpush1.msra.mxu0 %v971
      %1195 = vmatprep.subr.mxu0 %v974
      %1196 = vmatpush1.msra.mxu0 %v973
      %1197 = vmatprep.subr.mxu0 %v976
      %1198 = vmatpush1.msra.mxu0 %v975
      %1199 = vmatprep.subr.mxu0 %v978
      %1200 = vmatpush1.msra.mxu0 %v977
      %1201 = vmatprep.subr.mxu0 %v980
      %1202 = vmatpush1.msra.mxu0 %v979
      %1203 = vmatprep.subr.mxu0 %v982
      %1204 = vmatpush1.msra.mxu0 %v981
      %1205 = vmatprep.subr.mxu0 %v984
      %1206 = vmatpush1.msra.mxu0 %v983
      %1207 = vmatprep.subr.mxu0 %v986
      %1208 = vmatpush1.msra.mxu0 %v985
      %1209 = vmatprep.subr.mxu0 %v988
      %1210 = vmatpush1.msra.mxu0 %v987
      %1211 = vmatprep.subr.mxu0 %v990
      %1212 = vmatpush1.msra.mxu0 %v989
      %1213 = vmatprep.subr.mxu0 %v992
      %1214 = vmatpush1.msra.mxu0 %v991
      %1215 = vmatprep.subr.mxu0 %v994
      %1216 = vmatpush1.msra.mxu0 %v993
      %1217 = vmatprep.subr.mxu0 %v996
      %1218 = vmatpush1.msra.mxu0 %v995
      %1219 = vmatprep.subr.mxu0 %v998
      %1220 = vmatpush1.msra.mxu0 %v997
      %1221 = vmatprep.subr.mxu0 %v1000
      %1222 = vmatpush1.msra.mxu0 %v999
      %1223 = vmatprep.subr.mxu0 %v1002
      %1224 = vmatpush1.msra.mxu0 %v1001
      %1225 = vmatprep.subr.mxu0 %v1004
      %1226 = vmatpush1.msra.mxu0 %v1003
      %1227 = vmatprep.subr.mxu0 %v1006
      %1228 = vmatpush1.msra.mxu0 %v1005
      %1229 = vmatprep.subr.mxu0 %v1008
      %1230 = vmatpush1.msra.mxu0 %v1007
      %1231 = vmatprep.subr.mxu0 %v1010
      %1232 = vmatpush1.msra.mxu0 %v1009
      %1233 = vmatprep.subr.mxu0 %v1012
      %1234 = vmatpush1.msra.mxu0 %v1011
      %1235 = vmatprep.subr.mxu0 %v1014
      %1236 = vmatpush1.msra.mxu0 %v1013
      %1237 = vmatprep.subr.mxu0 %v1016
      %1238 = vmatpush1.msra.mxu0 %v1015
      %1239 = vmatprep.subr.mxu0 %v1018
      %1240 = vmatpush1.msra.mxu0 %v1017
      %1241 = vmatprep.subr.mxu0 %v1020
      %1242 = vmatpush1.msra.mxu0 %v1019
      %1243 = vmatprep.subr.mxu0 %v1022
      %1244 = vmatpush1.msra.mxu0 %v1021
      %1245 = vmatprep.subr.mxu0 %v1024
      %1246 = vmatpush1.msra.mxu0 %v1023
      %1247 = vmatprep.subr.mxu0 %v1026
      %1248 = vmatpush1.msra.mxu0 %v1025
      %1249 = vmatprep.subr.mxu0 %v1028
      %1250 = vmatpush1.msra.mxu0 %v1027
      %1251 = vmatprep.subr.mxu0 %v1030
      %1252 = vmatpush1.msra.mxu0 %v1029
      %1253 = vmatprep.mubr.f32.mxu0 %v733
      %1254 = vmatmul.mubr.f32.gmra.mrb[0].mxu0 %v731
      %v1255 = vpop.f32.mrb[0].mxu0
      %v1256 = vadd.f32 %v1179, %v1255
      %v1257 = vpop.f32.mrb[0].mxu0
      %v1258 = vadd.f32 %v1181, %v1257
      %1259 = vmatprep.mubr.f32.mxu0 %v739
      %1260 = vmatmul.mubr.f32.gmra.mrb[0].mxu0 %v737
      %v1261 = vpop.f32.mrb[0].mxu0
      %v1262 = vadd.f32 %v1185, %v1261
      %v1263 = vpop.f32.mrb[0].mxu0
      %v1264 = vadd.f32 %v1187, %v1263
      %1265 = vdwg.mxu0
      %v1266 = vld [vmem:[%s4] sm:$0xff]
      %v1267 = vld [vmem:[%s4 + $0x8] sm:$0xff]
      %v1268 = vld [vmem:[%s4 + $0x10] sm:$0xff]
      %v1269 = vld [vmem:[%s4 + $0x18] sm:$0xff]
      %v1270 = vld [vmem:[%s5] sm:$0xff]
      %v1271 = vld [vmem:[%s5 + $0x8] sm:$0xff]
      %v1272 = vld [vmem:[%s5 + $0x10] sm:$0xff]
      %v1273 = vld [vmem:[%s5 + $0x18] sm:$0xff]
      %v1274 = vmul.f32 %v1108, %v1266
      %v1275 = vmul.f32 %v1109, %v1267
      %v1276 = vmul.f32 %v1110, %v1268
      %v1277 = vmul.f32 %v1111, %v1269
      %v1278 = vmul.f32 %v1256, %v1270
      %v1279 = vmul.f32 %v1258, %v1271
      %v1280 = vmul.f32 %v1262, %v1272
      %v1281 = vmul.f32 %v1264, %v1273
      %v1282 = vsub.f32 %v1274, %v1278
      %v1283 = vsub.f32 %v1275, %v1279
      %v1284 = vsub.f32 %v1276, %v1280
      %v1285 = vsub.f32 %v1277, %v1281
      %v1286 = vmul.f32 %v1108, %v1270
      %v1287 = vmul.f32 %v1109, %v1271
      %v1288 = vmul.f32 %v1110, %v1272
      %v1289 = vmul.f32 %v1111, %v1273
      %v1290 = vmul.f32 %v1256, %v1266
      %v1291 = vmul.f32 %v1258, %v1267
      %v1292 = vmul.f32 %v1262, %v1268
      %v1293 = vmul.f32 %v1264, %v1269
      %v1294 = vadd.f32 %v1286, %v1290
      %v1295 = vadd.f32 %v1287, %v1291
      %v1296 = vadd.f32 %v1288, %v1292
      %v1297 = vadd.f32 %v1289, %v1293
      %v1298 = vld [vmem:[%s8] sm:$0xff]
      %v1299 = vld [vmem:[%s8 + $0x8] sm:$0xff]
      %v1301 = vsel %vm657, %v1298, 0
      %v1304 = vsel %vm657, %v1299, 0
      %1306 = vmatprep.subr.mxu0 %v1283
      %1307 = vmatpush1.msra.mxu0 %v1282
      %1308 = vmatprep.subr.mxu0 %v1285
      %1309 = vmatpush1.msra.mxu0 %v1284
      %1310 = vmatprep.subr.mxu0 0.0
      %1311 = vmatpush1.msra.mxu0 0.0
      %1312 = vmatprep.subr.mxu0 0.0
      %1313 = vmatpush1.msra.mxu0 0.0
      %1314 = vmatprep.subr.mxu0 0.0
      %1315 = vmatpush1.msra.mxu0 0.0
      %1316 = vmatprep.subr.mxu0 0.0
      %1317 = vmatpush1.msra.mxu0 0.0
      %1318 = vmatprep.subr.mxu0 0.0
      %1319 = vmatpush1.msra.mxu0 0.0
      %1320 = vmatprep.subr.mxu0 0.0
      %1321 = vmatpush1.msra.mxu0 0.0
      %1322 = vmatprep.subr.mxu0 0.0
      %1323 = vmatpush1.msra.mxu0 0.0
      %1324 = vmatprep.subr.mxu0 0.0
      %1325 = vmatpush1.msra.mxu0 0.0
      %1326 = vmatprep.subr.mxu0 0.0
      %1327 = vmatpush1.msra.mxu0 0.0
      %1328 = vmatprep.subr.mxu0 0.0
      %1329 = vmatpush1.msra.mxu0 0.0
      %1330 = vmatprep.subr.mxu0 0.0
      %1331 = vmatpush1.msra.mxu0 0.0
      %1332 = vmatprep.subr.mxu0 0.0
      %1333 = vmatpush1.msra.mxu0 0.0
      %1334 = vmatprep.subr.mxu0 0.0
      %1335 = vmatpush1.msra.mxu0 0.0
      %1336 = vmatprep.subr.mxu0 0.0
      %1337 = vmatpush1.msra.mxu0 0.0
      %1338 = vmatprep.subr.mxu0 0.0
      %1339 = vmatpush1.msra.mxu0 0.0
      %1340 = vmatprep.subr.mxu0 0.0
      %1341 = vmatpush1.msra.mxu0 0.0
      %1342 = vmatprep.subr.mxu0 0.0
      %1343 = vmatpush1.msra.mxu0 0.0
      %1344 = vmatprep.subr.mxu0 0.0
      %1345 = vmatpush1.msra.mxu0 0.0
      %1346 = vmatprep.subr.mxu0 0.0
      %1347 = vmatpush1.msra.mxu0 0.0
      %1348 = vmatprep.subr.mxu0 0.0
      %1349 = vmatpush1.msra.mxu0 0.0
      %1350 = vmatprep.subr.mxu0 0.0
      %1351 = vmatpush1.msra.mxu0 0.0
      %1352 = vmatprep.subr.mxu0 0.0
      %1353 = vmatpush1.msra.mxu0 0.0
      %1354 = vmatprep.subr.mxu0 0.0
      %1355 = vmatpush1.msra.mxu0 0.0
      %1356 = vmatprep.subr.mxu0 0.0
      %1357 = vmatpush1.msra.mxu0 0.0
      %1358 = vmatprep.subr.mxu0 0.0
      %1359 = vmatpush1.msra.mxu0 0.0
      %1360 = vmatprep.subr.mxu0 0.0
      %1361 = vmatpush1.msra.mxu0 0.0
      %1362 = vmatprep.subr.mxu0 0.0
      %1363 = vmatpush1.msra.mxu0 0.0
      %1364 = vmatprep.subr.mxu0 0.0
      %1365 = vmatpush1.msra.mxu0 0.0
      %1366 = vmatprep.subr.mxu0 0.0
      %1367 = vmatpush1.msra.mxu0 0.0
      %1368 = vmatprep.subr.mxu0 0.0
      %1369 = vmatpush1.msra.mxu0 0.0
      %1370 = vmatprep.mubr.f32.mxu0 0.0
      %1371 = vmatmul.mubr.f32.gmra.mrb[0].mxu0 %v1301
      %v1372 = vpop.f32.mrb[0].mxu0
      %v1373 = vadd.f32 0.0, %v1372
      %v1374 = vpop.f32.mrb[0].mxu0
      %v1375 = vadd.f32 0.0, %v1374
      %1376 = vmatprep.mubr.f32.mxu0 0.0
      %1377 = vmatmul.mubr.f32.gmra.mrb[0].mxu0 %v1304
      %v1378 = vpop.f32.mrb[0].mxu0
      %v1379 = vadd.f32 0.0, %v1378
      %v1380 = vpop.f32.mrb[0].mxu0
      %v1381 = vadd.f32 0.0, %v1380
      %1382 = vdwg.mxu0
      %v1383 = vld [vmem:[%s9] sm:$0xff]
      %v1384 = vld [vmem:[%s9 + $0x8] sm:$0xff]
      %v1386 = vsel %vm657, %v1383, 0
      %v1389 = vsel %vm657, %v1384, 0
      %1391 = vmatprep.subr.mxu0 %v1295
      %1392 = vmatpush1.msra.mxu0 %v1294
      %1393 = vmatprep.subr.mxu0 %v1297
      %1394 = vmatpush1.msra.mxu0 %v1296
      %1395 = vmatprep.subr.mxu0 0.0
      %1396 = vmatpush1.msra.mxu0 0.0
      %1397 = vmatprep.subr.mxu0 0.0
      %1398 = vmatpush1.msra.mxu0 0.0
      %1399 = vmatprep.subr.mxu0 0.0
      %1400 = vmatpush1.msra.mxu0 0.0
      %1401 = vmatprep.subr.mxu0 0.0
      %1402 = vmatpush1.msra.mxu0 0.0
      %1403 = vmatprep.subr.mxu0 0.0
      %1404 = vmatpush1.msra.mxu0 0.0
      %1405 = vmatprep.subr.mxu0 0.0
      %1406 = vmatpush1.msra.mxu0 0.0
      %1407 = vmatprep.subr.mxu0 0.0
      %1408 = vmatpush1.msra.mxu0 0.0
      %1409 = vmatprep.subr.mxu0 0.0
      %1410 = vmatpush1.msra.mxu0 0.0
      %1411 = vmatprep.subr.mxu0 0.0
      %1412 = vmatpush1.msra.mxu0 0.0
      %1413 = vmatprep.subr.mxu0 0.0
      %1414 = vmatpush1.msra.mxu0 0.0
      %1415 = vmatprep.subr.mxu0 0.0
      %1416 = vmatpush1.msra.mxu0 0.0
      %1417 = vmatprep.subr.mxu0 0.0
      %1418 = vmatpush1.msra.mxu0 0.0
      %1419 = vmatprep.subr.mxu0 0.0
      %1420 = vmatpush1.msra.mxu0 0.0
      %1421 = vmatprep.subr.mxu0 0.0
      %1422 = vmatpush1.msra.mxu0 0.0
      %1423 = vmatprep.subr.mxu0 0.0
      %1424 = vmatpush1.msra.mxu0 0.0
      %1425 = vmatprep.subr.mxu0 0.0
      %1426 = vmatpush1.msra.mxu0 0.0
      %1427 = vmatprep.subr.mxu0 0.0
      %1428 = vmatpush1.msra.mxu0 0.0
      %1429 = vmatprep.subr.mxu0 0.0
      %1430 = vmatpush1.msra.mxu0 0.0
      %1431 = vmatprep.subr.mxu0 0.0
      %1432 = vmatpush1.msra.mxu0 0.0
      %1433 = vmatprep.subr.mxu0 0.0
      %1434 = vmatpush1.msra.mxu0 0.0
      %1435 = vmatprep.subr.mxu0 0.0
      %1436 = vmatpush1.msra.mxu0 0.0
      %1437 = vmatprep.subr.mxu0 0.0
      %1438 = vmatpush1.msra.mxu0 0.0
      %1439 = vmatprep.subr.mxu0 0.0
      %1440 = vmatpush1.msra.mxu0 0.0
      %1441 = vmatprep.subr.mxu0 0.0
      %1442 = vmatpush1.msra.mxu0 0.0
      %1443 = vmatprep.subr.mxu0 0.0
      %1444 = vmatpush1.msra.mxu0 0.0
      %1445 = vmatprep.subr.mxu0 0.0
      %1446 = vmatpush1.msra.mxu0 0.0
      %1447 = vmatprep.subr.mxu0 0.0
      %1448 = vmatpush1.msra.mxu0 0.0
      %1449 = vmatprep.subr.mxu0 0.0
      %1450 = vmatpush1.msra.mxu0 0.0
      %1451 = vmatprep.subr.mxu0 0.0
      %1452 = vmatpush1.msra.mxu0 0.0
      %1453 = vmatprep.subr.mxu0 0.0
      %1454 = vmatpush1.msra.mxu0 0.0
      %1455 = vmatprep.mubr.f32.mxu0 0.0
      %1456 = vmatmul.mubr.f32.gmra.mrb[0].mxu0 %v1386
      %v1457 = vpop.f32.mrb[0].mxu0
      %v1458 = vadd.f32 0.0, %v1457
      %v1459 = vpop.f32.mrb[0].mxu0
      %v1460 = vadd.f32 0.0, %v1459
      %1461 = vmatprep.mubr.f32.mxu0 0.0
      %1462 = vmatmul.mubr.f32.gmra.mrb[0].mxu0 %v1389
      %v1463 = vpop.f32.mrb[0].mxu0
      %v1464 = vadd.f32 0.0, %v1463
      %v1465 = vpop.f32.mrb[0].mxu0
      %v1466 = vadd.f32 0.0, %v1465
      %1467 = vdwg.mxu0
      %v1468 = vsub.f32 %v1373, %v1458
      %v1469 = vsub.f32 %v1375, %v1460
      %v1470 = vsub.f32 %v1379, %v1464
      %v1471 = vsub.f32 %v1381, %v1466
      %1472 = vmatprep.subr.mxu0 %v1283
      %1473 = vmatpush1.msra.mxu0 %v1282
      %1474 = vmatprep.subr.mxu0 %v1285
      %1475 = vmatpush1.msra.mxu0 %v1284
      %1476 = vmatprep.subr.mxu0 0.0
      %1477 = vmatpush1.msra.mxu0 0.0
      %1478 = vmatprep.subr.mxu0 0.0
      %1479 = vmatpush1.msra.mxu0 0.0
      %1480 = vmatprep.subr.mxu0 0.0
      %1481 = vmatpush1.msra.mxu0 0.0
      %1482 = vmatprep.subr.mxu0 0.0
      %1483 = vmatpush1.msra.mxu0 0.0
      %1484 = vmatprep.subr.mxu0 0.0
      %1485 = vmatpush1.msra.mxu0 0.0
      %1486 = vmatprep.subr.mxu0 0.0
      %1487 = vmatpush1.msra.mxu0 0.0
      %1488 = vmatprep.subr.mxu0 0.0
      %1489 = vmatpush1.msra.mxu0 0.0
      %1490 = vmatprep.subr.mxu0 0.0
      %1491 = vmatpush1.msra.mxu0 0.0
      %1492 = vmatprep.subr.mxu0 0.0
      %1493 = vmatpush1.msra.mxu0 0.0
      %1494 = vmatprep.subr.mxu0 0.0
      %1495 = vmatpush1.msra.mxu0 0.0
      %1496 = vmatprep.subr.mxu0 0.0
      %1497 = vmatpush1.msra.mxu0 0.0
      %1498 = vmatprep.subr.mxu0 0.0
      %1499 = vmatpush1.msra.mxu0 0.0
      %1500 = vmatprep.subr.mxu0 0.0
      %1501 = vmatpush1.msra.mxu0 0.0
      %1502 = vmatprep.subr.mxu0 0.0
      %1503 = vmatpush1.msra.mxu0 0.0
      %1504 = vmatprep.subr.mxu0 0.0
      %1505 = vmatpush1.msra.mxu0 0.0
      %1506 = vmatprep.subr.mxu0 0.0
      %1507 = vmatpush1.msra.mxu0 0.0
      %1508 = vmatprep.subr.mxu0 0.0
      %1509 = vmatpush1.msra.mxu0 0.0
      %1510 = vmatprep.subr.mxu0 0.0
      %1511 = vmatpush1.msra.mxu0 0.0
      %1512 = vmatprep.subr.mxu0 0.0
      %1513 = vmatpush1.msra.mxu0 0.0
      %1514 = vmatprep.subr.mxu0 0.0
      %1515 = vmatpush1.msra.mxu0 0.0
      %1516 = vmatprep.subr.mxu0 0.0
      %1517 = vmatpush1.msra.mxu0 0.0
      %1518 = vmatprep.subr.mxu0 0.0
      %1519 = vmatpush1.msra.mxu0 0.0
      %1520 = vmatprep.subr.mxu0 0.0
      %1521 = vmatpush1.msra.mxu0 0.0
      %1522 = vmatprep.subr.mxu0 0.0
      %1523 = vmatpush1.msra.mxu0 0.0
      %1524 = vmatprep.subr.mxu0 0.0
      %1525 = vmatpush1.msra.mxu0 0.0
      %1526 = vmatprep.subr.mxu0 0.0
      %1527 = vmatpush1.msra.mxu0 0.0
      %1528 = vmatprep.subr.mxu0 0.0
      %1529 = vmatpush1.msra.mxu0 0.0
      %1530 = vmatprep.subr.mxu0 0.0
      %1531 = vmatpush1.msra.mxu0 0.0
      %1532 = vmatprep.subr.mxu0 0.0
      %1533 = vmatpush1.msra.mxu0 0.0
      %1534 = vmatprep.subr.mxu0 0.0
      %1535 = vmatpush1.msra.mxu0 0.0
      %1536 = vmatprep.mubr.f32.mxu0 0.0
      %1537 = vmatmul.mubr.f32.gmra.mrb[0].mxu0 %v1386
      %v1538 = vpop.f32.mrb[0].mxu0
      %v1539 = vadd.f32 0.0, %v1538
      %v1540 = vpop.f32.mrb[0].mxu0
      %v1541 = vadd.f32 0.0, %v1540
      %1542 = vmatprep.mubr.f32.mxu0 0.0
      %1543 = vmatmul.mubr.f32.gmra.mrb[0].mxu0 %v1389
      %v1544 = vpop.f32.mrb[0].mxu0
      %v1545 = vadd.f32 0.0, %v1544
      %v1546 = vpop.f32.mrb[0].mxu0
      %v1547 = vadd.f32 0.0, %v1546
      %1548 = vdwg.mxu0
      %1549 = vmatprep.subr.mxu0 %v1295
      %1550 = vmatpush1.msra.mxu0 %v1294
      %1551 = vmatprep.subr.mxu0 %v1297
      %1552 = vmatpush1.msra.mxu0 %v1296
      %1553 = vmatprep.subr.mxu0 0.0
      %1554 = vmatpush1.msra.mxu0 0.0
      %1555 = vmatprep.subr.mxu0 0.0
      %1556 = vmatpush1.msra.mxu0 0.0
      %1557 = vmatprep.subr.mxu0 0.0
      %1558 = vmatpush1.msra.mxu0 0.0
      %1559 = vmatprep.subr.mxu0 0.0
      %1560 = vmatpush1.msra.mxu0 0.0
      %1561 = vmatprep.subr.mxu0 0.0
      %1562 = vmatpush1.msra.mxu0 0.0
      %1563 = vmatprep.subr.mxu0 0.0
      %1564 = vmatpush1.msra.mxu0 0.0
      %1565 = vmatprep.subr.mxu0 0.0
      %1566 = vmatpush1.msra.mxu0 0.0
      %1567 = vmatprep.subr.mxu0 0.0
      %1568 = vmatpush1.msra.mxu0 0.0
      %1569 = vmatprep.subr.mxu0 0.0
      %1570 = vmatpush1.msra.mxu0 0.0
      %1571 = vmatprep.subr.mxu0 0.0
      %1572 = vmatpush1.msra.mxu0 0.0
      %1573 = vmatprep.subr.mxu0 0.0
      %1574 = vmatpush1.msra.mxu0 0.0
      %1575 = vmatprep.subr.mxu0 0.0
      %1576 = vmatpush1.msra.mxu0 0.0
      %1577 = vmatprep.subr.mxu0 0.0
      %1578 = vmatpush1.msra.mxu0 0.0
      %1579 = vmatprep.subr.mxu0 0.0
      %1580 = vmatpush1.msra.mxu0 0.0
      %1581 = vmatprep.subr.mxu0 0.0
      %1582 = vmatpush1.msra.mxu0 0.0
      %1583 = vmatprep.subr.mxu0 0.0
      %1584 = vmatpush1.msra.mxu0 0.0
      %1585 = vmatprep.subr.mxu0 0.0
      %1586 = vmatpush1.msra.mxu0 0.0
      %1587 = vmatprep.subr.mxu0 0.0
      %1588 = vmatpush1.msra.mxu0 0.0
      %1589 = vmatprep.subr.mxu0 0.0
      %1590 = vmatpush1.msra.mxu0 0.0
      %1591 = vmatprep.subr.mxu0 0.0
      %1592 = vmatpush1.msra.mxu0 0.0
      %1593 = vmatprep.subr.mxu0 0.0
      %1594 = vmatpush1.msra.mxu0 0.0
      %1595 = vmatprep.subr.mxu0 0.0
      %1596 = vmatpush1.msra.mxu0 0.0
      %1597 = vmatprep.subr.mxu0 0.0
      %1598 = vmatpush1.msra.mxu0 0.0
      %1599 = vmatprep.subr.mxu0 0.0
      %1600 = vmatpush1.msra.mxu0 0.0
      %1601 = vmatprep.subr.mxu0 0.0
      %1602 = vmatpush1.msra.mxu0 0.0
      %1603 = vmatprep.subr.mxu0 0.0
      %1604 = vmatpush1.msra.mxu0 0.0
      %1605 = vmatprep.subr.mxu0 0.0
      %1606 = vmatpush1.msra.mxu0 0.0
      %1607 = vmatprep.subr.mxu0 0.0
      %1608 = vmatpush1.msra.mxu0 0.0
      %1609 = vmatprep.subr.mxu0 0.0
      %1610 = vmatpush1.msra.mxu0 0.0
      %1611 = vmatprep.subr.mxu0 0.0
      %1612 = vmatpush1.msra.mxu0 0.0
      %1613 = vmatprep.mubr.f32.mxu0 0.0
      %1614 = vmatmul.mubr.f32.gmra.mrb[0].mxu0 %v1301
      %v1615 = vpop.f32.mrb[0].mxu0
      %v1616 = vadd.f32 %v1539, %v1615
      %v1617 = vpop.f32.mrb[0].mxu0
      %v1618 = vadd.f32 %v1541, %v1617
      %1619 = vmatprep.mubr.f32.mxu0 0.0
      %1620 = vmatmul.mubr.f32.gmra.mrb[0].mxu0 %v1304
      %v1621 = vpop.f32.mrb[0].mxu0
      %v1622 = vadd.f32 %v1545, %v1621
      %v1623 = vpop.f32.mrb[0].mxu0
      %v1624 = vadd.f32 %v1547, %v1623
      %1625 = vdwg.mxu0
      %v1626 = vld [vmem:[%s12] sm:$0xff]
      %v1627 = vld [vmem:[%s12 + $0x8] sm:$0xff]
      %v1628 = vld [vmem:[%s12 + $0x10] sm:$0xff]
      %v1629 = vld [vmem:[%s12 + $0x18] sm:$0xff]
      %v1630 = vld [vmem:[%s12 + $0x20] sm:$0xff]
      %v1631 = vld [vmem:[%s12 + $0x28] sm:$0xff]
      %v1632 = vld [vmem:[%s12 + $0x30] sm:$0xff]
      %v1633 = vld [vmem:[%s12 + $0x38] sm:$0xff]
      %v1634 = vld [vmem:[%s12 + $0x40] sm:$0xff]
      %v1635 = vld [vmem:[%s12 + $0x48] sm:$0xff]
      %v1636 = vld [vmem:[%s12 + $0x50] sm:$0xff]
      %v1637 = vld [vmem:[%s12 + $0x58] sm:$0xff]
      %v1638 = vld [vmem:[%s12 + $0x60] sm:$0xff]
      %v1639 = vld [vmem:[%s12 + $0x68] sm:$0xff]
      %v1640 = vld [vmem:[%s12 + $0x70] sm:$0xff]
      %v1641 = vld [vmem:[%s12 + $0x78] sm:$0xff]
      %v1642 = vld [vmem:[%s12 + $0x80] sm:$0xff]
      %v1643 = vld [vmem:[%s12 + $0x88] sm:$0xff]
      %v1644 = vld [vmem:[%s12 + $0x90] sm:$0xff]
      %v1645 = vld [vmem:[%s12 + $0x98] sm:$0xff]
      %v1646 = vld [vmem:[%s12 + $0xa0] sm:$0xff]
      %v1647 = vld [vmem:[%s12 + $0xa8] sm:$0xff]
      %v1648 = vld [vmem:[%s12 + $0xb0] sm:$0xff]
      %v1649 = vld [vmem:[%s12 + $0xb8] sm:$0xff]
      %v1650 = vld [vmem:[%s12 + $0xc0] sm:$0xff]
      %v1651 = vld [vmem:[%s12 + $0xc8] sm:$0xff]
      %v1652 = vld [vmem:[%s12 + $0xd0] sm:$0xff]
      %v1653 = vld [vmem:[%s12 + $0xd8] sm:$0xff]
      %v1654 = vld [vmem:[%s12 + $0xe0] sm:$0xff]
      %v1655 = vld [vmem:[%s12 + $0xe8] sm:$0xff]
      %v1656 = vld [vmem:[%s12 + $0xf0] sm:$0xff]
      %v1657 = vld [vmem:[%s12 + $0xf8] sm:$0xff]
      %v1658 = vld [vmem:[%s12 + $0x100] sm:$0xff]
      %v1659 = vld [vmem:[%s12 + $0x108] sm:$0xff]
      %v1660 = vld [vmem:[%s12 + $0x110] sm:$0xff]
      %v1661 = vld [vmem:[%s12 + $0x118] sm:$0xff]
      %v1662 = vld [vmem:[%s13] sm:$0xff]
      %v1663 = vld [vmem:[%s13 + $0x8] sm:$0xff]
      %v1664 = vld [vmem:[%s13 + $0x10] sm:$0xff]
      %v1665 = vld [vmem:[%s13 + $0x18] sm:$0xff]
      %v1666 = vld [vmem:[%s13 + $0x20] sm:$0xff]
      %v1667 = vld [vmem:[%s13 + $0x28] sm:$0xff]
      %v1668 = vld [vmem:[%s13 + $0x30] sm:$0xff]
      %v1669 = vld [vmem:[%s13 + $0x38] sm:$0xff]
      %v1670 = vld [vmem:[%s13 + $0x40] sm:$0xff]
      %v1671 = vld [vmem:[%s13 + $0x48] sm:$0xff]
      %v1672 = vld [vmem:[%s13 + $0x50] sm:$0xff]
      %v1673 = vld [vmem:[%s13 + $0x58] sm:$0xff]
      %v1674 = vld [vmem:[%s13 + $0x60] sm:$0xff]
      %v1675 = vld [vmem:[%s13 + $0x68] sm:$0xff]
      %v1676 = vld [vmem:[%s13 + $0x70] sm:$0xff]
      %v1677 = vld [vmem:[%s13 + $0x78] sm:$0xff]
      %v1678 = vld [vmem:[%s13 + $0x80] sm:$0xff]
      %v1679 = vld [vmem:[%s13 + $0x88] sm:$0xff]
      %v1680 = vld [vmem:[%s13 + $0x90] sm:$0xff]
      %v1681 = vld [vmem:[%s13 + $0x98] sm:$0xff]
      %v1682 = vld [vmem:[%s13 + $0xa0] sm:$0xff]
      %v1683 = vld [vmem:[%s13 + $0xa8] sm:$0xff]
      %v1684 = vld [vmem:[%s13 + $0xb0] sm:$0xff]
      %v1685 = vld [vmem:[%s13 + $0xb8] sm:$0xff]
      %v1686 = vld [vmem:[%s13 + $0xc0] sm:$0xff]
      %v1687 = vld [vmem:[%s13 + $0xc8] sm:$0xff]
      %v1688 = vld [vmem:[%s13 + $0xd0] sm:$0xff]
      %v1689 = vld [vmem:[%s13 + $0xd8] sm:$0xff]
      %v1690 = vld [vmem:[%s13 + $0xe0] sm:$0xff]
      %v1691 = vld [vmem:[%s13 + $0xe8] sm:$0xff]
      %v1692 = vld [vmem:[%s13 + $0xf0] sm:$0xff]
      %v1693 = vld [vmem:[%s13 + $0xf8] sm:$0xff]
      %v1694 = vld [vmem:[%s13 + $0x100] sm:$0xff]
      %v1695 = vld [vmem:[%s13 + $0x108] sm:$0xff]
      %v1696 = vld [vmem:[%s13 + $0x110] sm:$0xff]
      %v1697 = vld [vmem:[%s13 + $0x118] sm:$0xff]
      %v1699 = vsel %vm657, %v1618, 0
      %v1702 = vsel %vm657, %v1624, 0
      %1704 = vmatprep.subr.mxu0 %v1663
      %1705 = vmatpush1.msra.mxu0 %v1662
      %1706 = vmatprep.subr.mxu0 %v1665
      %1707 = vmatpush1.msra.mxu0 %v1664
      %1708 = vmatprep.subr.mxu0 %v1667
      %1709 = vmatpush1.msra.mxu0 %v1666
      %1710 = vmatprep.subr.mxu0 %v1669
      %1711 = vmatpush1.msra.mxu0 %v1668
      %1712 = vmatprep.subr.mxu0 %v1671
      %1713 = vmatpush1.msra.mxu0 %v1670
      %1714 = vmatprep.subr.mxu0 %v1673
      %1715 = vmatpush1.msra.mxu0 %v1672
      %1716 = vmatprep.subr.mxu0 %v1675
      %1717 = vmatpush1.msra.mxu0 %v1674
      %1718 = vmatprep.subr.mxu0 %v1677
      %1719 = vmatpush1.msra.mxu0 %v1676
      %1720 = vmatprep.subr.mxu0 %v1679
      %1721 = vmatpush1.msra.mxu0 %v1678
      %1722 = vmatprep.subr.mxu0 %v1681
      %1723 = vmatpush1.msra.mxu0 %v1680
      %1724 = vmatprep.subr.mxu0 %v1683
      %1725 = vmatpush1.msra.mxu0 %v1682
      %1726 = vmatprep.subr.mxu0 %v1685
      %1727 = vmatpush1.msra.mxu0 %v1684
      %1728 = vmatprep.subr.mxu0 %v1687
      %1729 = vmatpush1.msra.mxu0 %v1686
      %1730 = vmatprep.subr.mxu0 %v1689
      %1731 = vmatpush1.msra.mxu0 %v1688
      %1732 = vmatprep.subr.mxu0 %v1691
      %1733 = vmatpush1.msra.mxu0 %v1690
      %1734 = vmatprep.subr.mxu0 %v1693
      %1735 = vmatpush1.msra.mxu0 %v1692
      %1736 = vmatprep.subr.mxu0 %v1695
      %1737 = vmatpush1.msra.mxu0 %v1694
      %1738 = vmatprep.subr.mxu0 %v1697
      %1739 = vmatpush1.msra.mxu0 %v1696
      %1740 = vmatprep.subr.mxu0 0.0
      %1741 = vmatpush1.msra.mxu0 0.0
      %1742 = vmatprep.subr.mxu0 0.0
      %1743 = vmatpush1.msra.mxu0 0.0
      %1744 = vmatprep.subr.mxu0 0.0
      %1745 = vmatpush1.msra.mxu0 0.0
      %1746 = vmatprep.subr.mxu0 0.0
      %1747 = vmatpush1.msra.mxu0 0.0
      %1748 = vmatprep.subr.mxu0 0.0
      %1749 = vmatpush1.msra.mxu0 0.0
      %1750 = vmatprep.subr.mxu0 0.0
      %1751 = vmatpush1.msra.mxu0 0.0
      %1752 = vmatprep.subr.mxu0 0.0
      %1753 = vmatpush1.msra.mxu0 0.0
      %1754 = vmatprep.subr.mxu0 0.0
      %1755 = vmatpush1.msra.mxu0 0.0
      %1756 = vmatprep.subr.mxu0 0.0
      %1757 = vmatpush1.msra.mxu0 0.0
      %1758 = vmatprep.subr.mxu0 0.0
      %1759 = vmatpush1.msra.mxu0 0.0
      %1760 = vmatprep.subr.mxu0 0.0
      %1761 = vmatpush1.msra.mxu0 0.0
      %1762 = vmatprep.subr.mxu0 0.0
      %1763 = vmatpush1.msra.mxu0 0.0
      %1764 = vmatprep.subr.mxu0 0.0
      %1765 = vmatpush1.msra.mxu0 0.0
      %1766 = vmatprep.subr.mxu0 0.0
      %1767 = vmatpush1.msra.mxu0 0.0
      %1768 = vmatprep.mubr.f32.mxu0 %v1699
      %1769 = vmatmul.mubr.f32.gmra.mrb[0].mxu0 %v1616
      %v1770 = vpop.f32.mrb[0].mxu0
      %v1771 = vadd.f32 0.0, %v1770
      %v1772 = vpop.f32.mrb[0].mxu0
      %v1773 = vadd.f32 0.0, %v1772
      %1774 = vmatprep.mubr.f32.mxu0 %v1702
      %1775 = vmatmul.mubr.f32.gmra.mrb[0].mxu0 %v1622
      %v1776 = vpop.f32.mrb[0].mxu0
      %v1777 = vadd.f32 0.0, %v1776
      %v1778 = vpop.f32.mrb[0].mxu0
      %v1779 = vadd.f32 0.0, %v1778
      %1780 = vdwg.mxu0
      %v1782 = vsel %vm657, %v1469, 0
      %v1785 = vsel %vm657, %v1471, 0
      %1787 = vmatprep.subr.mxu0 %v1627
      %1788 = vmatpush1.msra.mxu0 %v1626
      %1789 = vmatprep.subr.mxu0 %v1629
      %1790 = vmatpush1.msra.mxu0 %v1628
      %1791 = vmatprep.subr.mxu0 %v1631
      %1792 = vmatpush1.msra.mxu0 %v1630
      %1793 = vmatprep.subr.mxu0 %v1633
      %1794 = vmatpush1.msra.mxu0 %v1632
      %1795 = vmatprep.subr.mxu0 %v1635
      %1796 = vmatpush1.msra.mxu0 %v1634
      %1797 = vmatprep.subr.mxu0 %v1637
      %1798 = vmatpush1.msra.mxu0 %v1636
      %1799 = vmatprep.subr.mxu0 %v1639
      %1800 = vmatpush1.msra.mxu0 %v1638
      %1801 = vmatprep.subr.mxu0 %v1641
      %1802 = vmatpush1.msra.mxu0 %v1640
      %1803 = vmatprep.subr.mxu0 %v1643
      %1804 = vmatpush1.msra.mxu0 %v1642
      %1805 = vmatprep.subr.mxu0 %v1645
      %1806 = vmatpush1.msra.mxu0 %v1644
      %1807 = vmatprep.subr.mxu0 %v1647
      %1808 = vmatpush1.msra.mxu0 %v1646
      %1809 = vmatprep.subr.mxu0 %v1649
      %1810 = vmatpush1.msra.mxu0 %v1648
      %1811 = vmatprep.subr.mxu0 %v1651
      %1812 = vmatpush1.msra.mxu0 %v1650
      %1813 = vmatprep.subr.mxu0 %v1653
      %1814 = vmatpush1.msra.mxu0 %v1652
      %1815 = vmatprep.subr.mxu0 %v1655
      %1816 = vmatpush1.msra.mxu0 %v1654
      %1817 = vmatprep.subr.mxu0 %v1657
      %1818 = vmatpush1.msra.mxu0 %v1656
      %1819 = vmatprep.subr.mxu0 %v1659
      %1820 = vmatpush1.msra.mxu0 %v1658
      %1821 = vmatprep.subr.mxu0 %v1661
      %1822 = vmatpush1.msra.mxu0 %v1660
      %1823 = vmatprep.subr.mxu0 0.0
      %1824 = vmatpush1.msra.mxu0 0.0
      %1825 = vmatprep.subr.mxu0 0.0
      %1826 = vmatpush1.msra.mxu0 0.0
      %1827 = vmatprep.subr.mxu0 0.0
      %1828 = vmatpush1.msra.mxu0 0.0
      %1829 = vmatprep.subr.mxu0 0.0
      %1830 = vmatpush1.msra.mxu0 0.0
      %1831 = vmatprep.subr.mxu0 0.0
      %1832 = vmatpush1.msra.mxu0 0.0
      %1833 = vmatprep.subr.mxu0 0.0
      %1834 = vmatpush1.msra.mxu0 0.0
      %1835 = vmatprep.subr.mxu0 0.0
      %1836 = vmatpush1.msra.mxu0 0.0
      %1837 = vmatprep.subr.mxu0 0.0
      %1838 = vmatpush1.msra.mxu0 0.0
      %1839 = vmatprep.subr.mxu0 0.0
      %1840 = vmatpush1.msra.mxu0 0.0
      %1841 = vmatprep.subr.mxu0 0.0
      %1842 = vmatpush1.msra.mxu0 0.0
      %1843 = vmatprep.subr.mxu0 0.0
      %1844 = vmatpush1.msra.mxu0 0.0
      %1845 = vmatprep.subr.mxu0 0.0
      %1846 = vmatpush1.msra.mxu0 0.0
      %1847 = vmatprep.subr.mxu0 0.0
      %1848 = vmatpush1.msra.mxu0 0.0
      %1849 = vmatprep.subr.mxu0 0.0
      %1850 = vmatpush1.msra.mxu0 0.0
      %1851 = vmatprep.mubr.f32.mxu0 %v1782
      %1852 = vmatmul.mubr.f32.gmra.mrb[0].mxu0 %v1468
      %v1853 = vpop.f32.mrb[0].mxu0
      %v1854 = vadd.f32 %v1771, %v1853
      %v1855 = vpop.f32.mrb[0].mxu0
      %v1856 = vadd.f32 %v1773, %v1855
      %1857 = vmatprep.mubr.f32.mxu0 %v1785
      %1858 = vmatmul.mubr.f32.gmra.mrb[0].mxu0 %v1470
      %v1859 = vpop.f32.mrb[0].mxu0
      %v1860 = vadd.f32 %v1777, %v1859
      %v1861 = vpop.f32.mrb[0].mxu0
      %v1862 = vadd.f32 %v1779, %v1861
      %1863 = vdwg.mxu0
      %v1864 = vmul.f32 %v1854, 0.00390625
      %v1865 = vmul.f32 %v1856, 0.00390625
      %v1866 = vmul.f32 %v1860, 0.00390625
      %v1867 = vmul.f32 %v1862, 0.00390625
      %v1868 = vsub.f32 %v528, %v647
      %v1869 = vsub.f32 %v529, %v648
      %v1870 = vsub.f32 %v530, %v649
      %v1871 = vsub.f32 %v531, %v650
      %v1872 = vand.u32 2147483647, %v1868
      %v1873 = vand.u32 2147483647, %v1869
      %v1874 = vand.u32 2147483647, %v1870
      %v1875 = vand.u32 2147483647, %v1871
      %v1876 = vmul.f32 %v1864, %v528
      %v1877 = vmul.f32 %v1865, %v529
      %v1878 = vmul.f32 %v1866, %v530
      %v1879 = vmul.f32 %v1867, %v531
      %v1880 = vmul.f32 %v1864, %v647
      %v1881 = vmul.f32 %v1865, %v648
      %v1882 = vmul.f32 %v1866, %v649
      %v1883 = vmul.f32 %v1867, %v650
      %v1884 = vadd.f32 %v1876, %v1880
      %v1885 = vadd.f32 %v1877, %v1881
      %v1886 = vadd.f32 %v1878, %v1882
      %v1887 = vadd.f32 %v1879, %v1883
      %v1888 = vadd.f32 %v1884, %v1872
      %v1889 = vadd.f32 %v1885, %v1873
      %v1890 = vadd.f32 %v1886, %v1874
      %v1891 = vadd.f32 %v1887, %v1875
      %v1892 = vadd.f32 %v528, %v1888
      %v1893 = vadd.f32 %v529, %v1889
      %v1894 = vadd.f32 %v530, %v1890
      %v1895 = vadd.f32 %v531, %v1891
      %1896 = vst [vmem:[%s522] sm:$0xff] %v1892
      %1897 = vst [vmem:[%s522 + $0x8] sm:$0xff] %v1893
      %1898 = vst [vmem:[%s522 + $0x10] sm:$0xff] %v1894
      %1899 = vst [vmem:[%s522 + $0x18] sm:$0xff] %v1895
      %v1900 = vadd.f32 %v647, %v1888
      %v1901 = vadd.f32 %v648, %v1889
      %v1902 = vadd.f32 %v649, %v1890
      %v1903 = vadd.f32 %v650, %v1891
      %1904 = vst [vmem:[%s527] sm:$0xff] %v1900
      %1905 = vst [vmem:[%s527 + $0x8] sm:$0xff] %v1901
      %1906 = vst [vmem:[%s527 + $0x10] sm:$0xff] %v1902
      %1907 = vst [vmem:[%s527 + $0x18] sm:$0xff] %v1903
      %p1908 = scmp.lt.s32.totalorder %s27, 1
      %s1909 = scalar_select %p1908, %s27, 1
      %s1910 = smul.addr %s1909, 4
      %s1911 = smul.addr %s1910, 8
      %s1912 = scalar_lea.vmem %s14, %s1911
      %p1913 = scmp.lt.s32.totalorder %s27, 1
      %s1914 = scalar_select %p1913, %s27, 1
      %s1915 = smul.addr %s1914, 4
      %s1916 = smul.addr %s1915, 8
      %s1917 = scalar_lea.vmem %s15, %s1916
      // Predicated region
      $region77: #{mycdf_forward.1} parent=75 // pred_check
        %p1918 = pneg %p349
      $region78: #{mycdf_forward.1} parent=75 // pred_check_branch
        %1920 = sbr.rel (%p1918) target = $region80
      $region79: #{mycdf_forward.1} parent=75 // pred_region
        _
      $region80: #{mycdf_forward.1} parent=75 // pred_fallthru
        _
      // Predicated region
      $region81: #{mycdf_forward.1} parent=75 // pred_check
        %p1921 = pneg %p375
      $region82: #{mycdf_forward.1} parent=75 // pred_check_branch
        %1923 = sbr.rel (%p1921) target = $region84
      $region83: #{mycdf_forward.1} parent=75 // pred_region
        _
      $region84: #{mycdf_forward.1} parent=75 // pred_fallthru
        _
    $region76: #{mycdf_forward.1} parent=5 // pred_fallthru
      _
    %p1924 = scmp.le.s32.totalorder 2, %s22
    // Predicated region
    $region85: #{mycdf_forward.1} parent=5 // pred_check
      %p1925 = pneg %p1924
    $region86: #{mycdf_forward.1} parent=5 // pred_check_branch
      %1927 = sbr.rel (%p1925) target = $region88
    $region87: #{mycdf_forward.1} parent=5 // pred_region
      %s1928 = ssub.s32 %s22, 2
      // Predicated region
      $region89: #{mycdf_forward.1} parent=87 // pred_check
        %p1929 = pneg %p355
      $region90: #{mycdf_forward.1} parent=87 // pred_check_branch
        %1931 = sbr.rel (%p1929) target = $region92
      $region91: #{mycdf_forward.1} parent=87 // pred_region
        %p1932 = scmp.lt.s32.totalorder %s28, 1
        %s1933 = scalar_select %p1932, %s28, 1
        %s1934 = smul.addr %s1933, 4
        %s1935 = smul.addr %s1934, 8
        %s1936 = scalar_lea.vmem %s14, %s1935
      $region92: #{mycdf_forward.1} parent=87 // pred_fallthru
        _
      // Predicated region
      $region93: #{mycdf_forward.1} parent=87 // pred_check
        %p1937 = pneg %p381
      $region94: #{mycdf_forward.1} parent=87 // pred_check_branch
        %1939 = sbr.rel (%p1937) target = $region96
      $region95: #{mycdf_forward.1} parent=87 // pred_region
        %p1940 = scmp.lt.s32.totalorder %s28, 1
        %s1941 = scalar_select %p1940, %s28, 1
        %s1942 = smul.addr %s1941, 4
        %s1943 = smul.addr %s1942, 8
        %s1944 = scalar_lea.vmem %s15, %s1943
      $region96: #{mycdf_forward.1} parent=87 // pred_fallthru
        _
    $region88: #{mycdf_forward.1} parent=5 // pred_fallthru
      _
  $region6: #{mycdf_forward.1} parent=0 // loop_footer
    %s26 = sadd.s32 1, %s22
  $region7: #{mycdf_forward.1} parent=0 // loop_footer_branch
    %21 = sbr.rel target = $region3
  $region8: #{mycdf_forward.1} parent=0 // loop_exit
    _

</llo_original>
